<compile_context>
chip_gen: v7x
topology: tpu7x:2x2x1
jax: 0.10.0
libtpu: 0.0.40
codegen_flags: <defaults>
</compile_context>

<pallas_src>
import functools

import jax
import jax.numpy as jnp
import numpy as np
from jax.experimental import pallas as pl
from jax.experimental.pallas import tpu as pltpu


# ----------------------------- model dimensions -----------------------------
B        = 2     # batch
N_GROUP  = 8     # "height" axis of z (dim 1 in PyTorch)
T        = 64    # time steps (whole time axis processed per grid step)
N_MEL    = 16    # conditioning (spect) channels
N_CH     = 32    # WN hidden channels
N_LAYERS = 2     # WN gated layers
N_SPK    = 4     # speaker embedding table size


# ------------------------------- Pallas kernel ------------------------------
def _wn_coupling_kernel(z_ref, sp_ref, spk_ref,
                        start_ref, layer_ref, end_ref,
                        audio_ref, logs_ref,
                        *, n_group, n_mel, n_ch, n_layers):
    H, M, C, L = n_group, n_mel, n_ch, n_layers

    z = z_ref[0]                                    # (H, T)   channels-first
    cond = sp_ref[0] + spk_ref[0]                   # (M, T)   mel + speaker emb

    # ---- WN: start 1x1 conv on z_shifted = z[:-1] ----
    # start slab layout: [ W^T (C, H-1) | b (C, 1) ]
    h = (jnp.dot(start_ref[:, : H - 1], z[: H - 1],
                 preferred_element_type=jnp.float32)
         + start_ref[:, H - 1:])                    # (C, T)

    # ---- WN: gated residual layers (unrolled, static) ----
    # layer slab layout (per layer, lane axis):
    #   [ fused(in|cond) W^T (2C, C+M) | fused b (2C,1) | rs W^T (2C, C) | rs b (2C,1) ]
    skip = None
    for l in range(L):
        fw = layer_ref[l, :, : C + M]                        # (2C, C+M)
        fb = layer_ref[l, :, C + M:C + M + 1]                # (2C, 1)
        rw = layer_ref[l, :, C + M + 1:C + M + 1 + C]        # (2C, C)
        rb = layer_ref[l, :, C + M + 1 + C:]                 # (2C, 1)

        acts = (jnp.dot(fw, jnp.concatenate([h, cond], axis=0),
                        preferred_element_type=jnp.float32) + fb)   # (2C, T)
        gate = jnp.tanh(acts[:C]) * jax.nn.sigmoid(acts[C:])        # (C, T)
        rs = jnp.dot(rw, gate, preferred_element_type=jnp.float32) + rb   # (2C, T)

        h = h + rs[:C]
        skip = rs[C:] if skip is None else skip + rs[C:]

    # ---- WN: end 1x1 conv -> (log_s, t) ----
    # end slab layout: [ W^T (2(H-1), C) | b (2(H-1), 1) ]
    out = (jnp.dot(end_ref[:, :C], skip,
                   preferred_element_type=jnp.float32)
           + end_ref[:, C:])                        # (2(H-1), T)
    log_s = out[: H - 1]                            # (H-1, T)
    t = out[H - 1:]                                 # (H-1, T)

    # ---- affine coupling, single full-tile lane-dense stores ----
    audio_ref[0] = jnp.concatenate([z[:1], z[1:] * jnp.exp(log_s) + t], axis=0)
    logs_ref[0] = log_s


# --------------------------------- wrapper ----------------------------------
def waveflow_coupling_forward(z, spect, speaker_ids, params):
    """z: (B, n_group, T) f32, spect: (B, n_mel, T) f32, speaker_ids: (B,) i32.

    Returns (audio_out, log_s) in the exact PyTorch layouts:
      audio_out: (B, n_group, T), log_s: (B, n_group-1, T).
    """
    Bz, H, Tz = z.shape
    M = spect.shape[1]
    C, L = N_CH, N_LAYERS

    # ---- pack weights into 3 channel-major slabs (fewer, denser DMAs) ----
    start_slab = jnp.concatenate(
        [params["start_w"].T, params["start_b"].T], axis=1)            # (C, H)
    fused_w = jnp.concatenate(
        [jnp.swapaxes(params["in_w"], 1, 2),                           # (L, 2C, C)
         jnp.swapaxes(params["cond_w"], 1, 2)], axis=2)                # (L, 2C, C+M)
    fused_b = jnp.swapaxes(params["in_b"] + params["cond_b"], 1, 2)    # (L, 2C, 1)
    layer_slab = jnp.concatenate(
        [fused_w, fused_b,
         jnp.swapaxes(params["rs_w"], 1, 2),
         jnp.swapaxes(params["rs_b"], 1, 2)], axis=2)                  # (L, 2C, C+M+C+2)
    end_slab = jnp.concatenate(
        [params["end_w"].T, params["end_b"].T], axis=1)                # (2(H-1), C+1)
    spk = params["emb"][speaker_ids][:, :, None]                       # (B, M, 1)

    slab_w = layer_slab.shape[-1]
    kernel = functools.partial(_wn_coupling_kernel,
                               n_group=H, n_mel=M, n_ch=C, n_layers=L)

    audio, log_s = pl.pallas_call(
        kernel,
        out_shape=(jax.ShapeDtypeStruct((Bz, H, Tz), jnp.float32),
                   jax.ShapeDtypeStruct((Bz, H - 1, Tz), jnp.float32)),
        grid_spec=pltpu.PrefetchScalarGridSpec(
            num_scalar_prefetch=0,
            grid=(Bz,),
            in_specs=[
                pl.BlockSpec((1, H, Tz),  lambda b: (b, 0, 0)),   # z (channels-first)
                pl.BlockSpec((1, M, Tz),  lambda b: (b, 0, 0)),   # spect
                pl.BlockSpec((1, M, 1),   lambda b: (b, 0, 0)),   # speaker emb column
                pl.BlockSpec((C, H),      lambda b: (0, 0)),      # start slab
                pl.BlockSpec((L, 2 * C, slab_w), lambda b: (0, 0, 0)),   # layer slab
                pl.BlockSpec((2 * (H - 1), C + 1), lambda b: (0, 0)),    # end slab
            ],
            out_specs=[
                pl.BlockSpec((1, H, Tz),     lambda b: (b, 0, 0)),  # audio_out
                pl.BlockSpec((1, H - 1, Tz), lambda b: (b, 0, 0)),  # log_s
            ],
        ),
        compiler_params=pltpu.CompilerParams(
            dimension_semantics=("parallel",)),
    )(z, spect, spk, start_slab, layer_slab, end_slab)

    # already in PyTorch (B, channels, T) layout -- no transposes needed
    return audio, log_s


# ------------------------------ pure-JAX reference --------------------------
def reference_forward(z, spect, speaker_ids, p):
    H, C, L = N_GROUP, N_CH, N_LAYERS
    x = jnp.swapaxes(z[:, :-1], 1, 2)                                 # (B,T,H-1)
    c = jnp.swapaxes(spect, 1, 2) + p["emb"][speaker_ids][:, None, :] # (B,T,n_mel)
    h = x @ p["start_w"] + p["start_b"]
    skip = jnp.zeros_like(h)
    for l in range(L):
        acts = h @ p["in_w"][l] + p["in_b"][l] + c @ p["cond_w"][l] + p["cond_b"][l]
        gate = jnp.tanh(acts[..., :C]) * jax.nn.sigmoid(acts[..., C:])
        rs = gate @ p["rs_w"][l] + p["rs_b"][l]
        h = h + rs[..., :C]
        skip = skip + rs[..., C:]
    out = skip @ p["end_w"] + p["end_b"]
    log_s = jnp.swapaxes(out[..., : H - 1], 1, 2)
    t = jnp.swapaxes(out[..., H - 1:], 1, 2)
    audio = jnp.concatenate([z[:, :1], z[:, 1:] * jnp.exp(log_s) + t], axis=1)
    return audio, log_s


# --------------------------------- params -----------------------------------
def init_params(key):
    H, C, L, M = N_GROUP, N_CH, N_LAYERS, N_MEL
    ks = jax.random.split(key, 9)
    s = 0.05
    return {
        "emb":     s * jax.random.normal(ks[0], (N_SPK, M), jnp.float32),
        "start_w": s * jax.random.normal(ks[1], (H - 1, C), jnp.float32),
        "start_b": jnp.zeros((1, C), jnp.float32),
        "in_w":    s * jax.random.normal(ks[2], (L, C, 2 * C), jnp.float32),
        "in_b":    jnp.zeros((L, 1, 2 * C), jnp.float32),
        "cond_w":  s * jax.random.normal(ks[3], (L, M, 2 * C), jnp.float32),
        "cond_b":  jnp.zeros((L, 1, 2 * C), jnp.float32),
        "rs_w":    s * jax.random.normal(ks[4], (L, C, 2 * C), jnp.float32),
        "rs_b":    jnp.zeros((L, 1, 2 * C), jnp.float32),
        "end_w":   s * jax.random.normal(ks[5], (C, 2 * (H - 1)), jnp.float32),
        "end_b":   jnp.zeros((1, 2 * (H - 1)), jnp.float32),
    }


if __name__ == "__main__":
    key = jax.random.PRNGKey(0)
    kz, ks, kid, kp = jax.random.split(key, 4)

    z = jax.random.normal(kz, (B, N_GROUP, T), jnp.float32)
    spect = jax.random.normal(ks, (B, N_MEL, T), jnp.float32)
    speaker_ids = jax.random.randint(kid, (B,), 0, N_SPK, jnp.int32)
    params = init_params(kp)

    audio_out, log_s = waveflow_coupling_forward(z, spect, speaker_ids, params)
    jax.block_until_ready((audio_out, log_s))

    audio_ref, logs_ref = reference_forward(z, spect, speaker_ids, params)
    np.testing.assert_allclose(np.asarray(audio_out), np.asarray(audio_ref),
                               rtol=1e-5, atol=1e-5)
    np.testing.assert_allclose(np.asarray(log_s), np.asarray(logs_ref),
                               rtol=1e-5, atol=1e-5)

    print("KERNEL_OK")
</pallas_src>

<mosaic_0001>
module attributes {stable_mosaic.version = 11 : i64} {
  func.func @_wn_coupling_kernel(%arg0: i32, %arg1: memref<1x8x64xf32, #tpu.memory_space<vmem>>, %arg2: memref<1x16x64xf32, #tpu.memory_space<vmem>>, %arg3: memref<1x16x1xf32, #tpu.memory_space<vmem>>, %arg4: memref<32x8xf32, #tpu.memory_space<vmem>>, %arg5: memref<2x64x82xf32, #tpu.memory_space<vmem>>, %arg6: memref<14x33xf32, #tpu.memory_space<vmem>>, %arg7: memref<1x8x64xf32, #tpu.memory_space<vmem>>, %arg8: memref<1x7x64xf32, #tpu.memory_space<vmem>>) attributes {dimension_semantics = [#tpu.dimension_semantics<parallel>], iteration_bounds = array<i64: 2>, scalar_prefetch = 0 : i64, scratch_operands = 0 : i64, tpu.core_type = #tpu.core_type<tc>, window_params = [{transform_indices = @transform_0, window_bounds = array<i64: 1, 8, 64>}, {transform_indices = @transform_1, window_bounds = array<i64: 1, 16, 64>}, {transform_indices = @transform_2, window_bounds = array<i64: 1, 16, 1>}, {pipeline_mode = #tpu.pipeline_mode<synchronous>, transform_indices = @transform_3, window_bounds = array<i64: 32, 8>}, {pipeline_mode = #tpu.pipeline_mode<synchronous>, transform_indices = @transform_4, window_bounds = array<i64: 2, 64, 82>}, {pipeline_mode = #tpu.pipeline_mode<synchronous>, transform_indices = @transform_5, window_bounds = array<i64: 14, 33>}, {transform_indices = @transform_6, window_bounds = array<i64: 1, 8, 64>}, {transform_indices = @transform_7, window_bounds = array<i64: 1, 7, 64>}]} {
    %c0 = arith.constant 0 : index
    %c0_0 = arith.constant 0 : index
    %c0_1 = arith.constant 0 : index
    %0 = vector.load %arg1[%c0, %c0_0, %c0_1] : memref<1x8x64xf32, #tpu.memory_space<vmem>>, vector<1x8x64xf32>
    %1 = vector.shape_cast %0 : vector<1x8x64xf32> to vector<8x64xf32>
    %c0_2 = arith.constant 0 : index
    %c0_3 = arith.constant 0 : index
    %c0_4 = arith.constant 0 : index
    %2 = vector.load %arg2[%c0_2, %c0_3, %c0_4] : memref<1x16x64xf32, #tpu.memory_space<vmem>>, vector<1x16x64xf32>
    %3 = vector.shape_cast %2 : vector<1x16x64xf32> to vector<16x64xf32>
    %c0_5 = arith.constant 0 : index
    %c0_6 = arith.constant 0 : index
    %c0_7 = arith.constant 0 : index
    %4 = vector.load %arg3[%c0_5, %c0_6, %c0_7] : memref<1x16x1xf32, #tpu.memory_space<vmem>>, vector<1x16x1xf32>
    %5 = vector.shape_cast %4 : vector<1x16x1xf32> to vector<16x1xf32>
    %6 = vector.broadcast %5 : vector<16x1xf32> to vector<16x64xf32>
    %7 = arith.addf %3, %6 : vector<16x64xf32>
    %c0_8 = arith.constant 0 : index
    %c0_9 = arith.constant 0 : index
    %8 = vector.load %arg4[%c0_8, %c0_9] : memref<32x8xf32, #tpu.memory_space<vmem>>, vector<32x7xf32>
    %9 = vector.extract_strided_slice %1 {offsets = [0, 0], sizes = [7, 64], strides = [1, 1]} : vector<8x64xf32> to vector<7x64xf32>
    %cst = arith.constant dense<0.000000e+00> : vector<32x64xf32>
    %10 = tpu.matmul %8, %9, %cst {dimension_numbers = #tpu.dot_dimension_numbers<[1], [0], [0], [1], [0, 0, 1, 1], [], []>} : vector<32x7xf32>, vector<7x64xf32>, vector<32x64xf32> -> vector<32x64xf32>
    %c0_10 = arith.constant 0 : index
    %c7 = arith.constant 7 : index
    %11 = vector.load %arg4[%c0_10, %c7] : memref<32x8xf32, #tpu.memory_space<vmem>>, vector<32x1xf32>
    %12 = vector.broadcast %11 : vector<32x1xf32> to vector<32x64xf32>
    %13 = arith.addf %10, %12 : vector<32x64xf32>
    %c0_11 = arith.constant 0 : index
    %c0_12 = arith.constant 0 : index
    %c0_13 = arith.constant 0 : index
    %14 = vector.load %arg5[%c0_11, %c0_12, %c0_13] : memref<2x64x82xf32, #tpu.memory_space<vmem>>, vector<1x64x48xf32>
    %15 = vector.shape_cast %14 : vector<1x64x48xf32> to vector<64x48xf32>
    %c0_14 = arith.constant 0 : index
    %c0_15 = arith.constant 0 : index
    %c48 = arith.constant 48 : index
    %16 = vector.load %arg5[%c0_14, %c0_15, %c48] : memref<2x64x82xf32, #tpu.memory_space<vmem>>, vector<1x64x1xf32>
    %17 = vector.shape_cast %16 : vector<1x64x1xf32> to vector<64x1xf32>
    %c0_16 = arith.constant 0 : index
    %c0_17 = arith.constant 0 : index
    %c49 = arith.constant 49 : index
    %18 = vector.load %arg5[%c0_16, %c0_17, %c49] : memref<2x64x82xf32, #tpu.memory_space<vmem>>, vector<1x64x32xf32>
    %19 = vector.shape_cast %18 : vector<1x64x32xf32> to vector<64x32xf32>
    %c0_18 = arith.constant 0 : index
    %c0_19 = arith.constant 0 : index
    %c81 = arith.constant 81 : index
    %20 = vector.load %arg5[%c0_18, %c0_19, %c81] : memref<2x64x82xf32, #tpu.memory_space<vmem>>, vector<1x64x1xf32>
    %21 = vector.shape_cast %20 : vector<1x64x1xf32> to vector<64x1xf32>
    %22 = tpu.concatenate %13, %7 in 0 : vector<32x64xf32>, vector<16x64xf32> -> vector<48x64xf32>
    %cst_20 = arith.constant dense<0.000000e+00> : vector<64x64xf32>
    %23 = tpu.matmul %15, %22, %cst_20 {dimension_numbers = #tpu.dot_dimension_numbers<[1], [0], [0], [1], [0, 0, 1, 1], [], []>} : vector<64x48xf32>, vector<48x64xf32>, vector<64x64xf32> -> vector<64x64xf32>
    %24 = vector.broadcast %17 : vector<64x1xf32> to vector<64x64xf32>
    %25 = arith.addf %23, %24 : vector<64x64xf32>
    %26 = vector.extract_strided_slice %25 {offsets = [0, 0], sizes = [32, 64], strides = [1, 1]} : vector<64x64xf32> to vector<32x64xf32>
    %27 = math.tanh %26 : vector<32x64xf32>
    %28 = vector.extract_strided_slice %25 {offsets = [32, 0], sizes = [32, 64], strides = [1, 1]} : vector<64x64xf32> to vector<32x64xf32>
    %29 = arith.negf %28 : vector<32x64xf32>
    %30 = math.exp %29 : vector<32x64xf32>
    %cst_21 = arith.constant 1.000000e+00 : f32
    %31 = vector.broadcast %cst_21 : f32 to vector<32x64xf32>
    %32 = arith.addf %31, %30 : vector<32x64xf32>
    %33 = arith.divf %31, %32 : vector<32x64xf32>
    %34 = arith.mulf %27, %33 : vector<32x64xf32>
    %cst_22 = arith.constant dense<0.000000e+00> : vector<64x64xf32>
    %35 = tpu.matmul %19, %34, %cst_22 {dimension_numbers = #tpu.dot_dimension_numbers<[1], [0], [0], [1], [0, 0, 1, 1], [], []>} : vector<64x32xf32>, vector<32x64xf32>, vector<64x64xf32> -> vector<64x64xf32>
    %36 = vector.broadcast %21 : vector<64x1xf32> to vector<64x64xf32>
    %37 = arith.addf %35, %36 : vector<64x64xf32>
    %38 = vector.extract_strided_slice %37 {offsets = [0, 0], sizes = [32, 64], strides = [1, 1]} : vector<64x64xf32> to vector<32x64xf32>
    %39 = arith.addf %13, %38 : vector<32x64xf32>
    %40 = vector.extract_strided_slice %37 {offsets = [32, 0], sizes = [32, 64], strides = [1, 1]} : vector<64x64xf32> to vector<32x64xf32>
    %c1 = arith.constant 1 : index
    %c0_23 = arith.constant 0 : index
    %c0_24 = arith.constant 0 : index
    %41 = vector.load %arg5[%c1, %c0_23, %c0_24] : memref<2x64x82xf32, #tpu.memory_space<vmem>>, vector<1x64x48xf32>
    %42 = vector.shape_cast %41 : vector<1x64x48xf32> to vector<64x48xf32>
    %c1_25 = arith.constant 1 : index
    %c0_26 = arith.constant 0 : index
    %c48_27 = arith.constant 48 : index
    %43 = vector.load %arg5[%c1_25, %c0_26, %c48_27] : memref<2x64x82xf32, #tpu.memory_space<vmem>>, vector<1x64x1xf32>
    %44 = vector.shape_cast %43 : vector<1x64x1xf32> to vector<64x1xf32>
    %c1_28 = arith.constant 1 : index
    %c0_29 = arith.constant 0 : index
    %c49_30 = arith.constant 49 : index
    %45 = vector.load %arg5[%c1_28, %c0_29, %c49_30] : memref<2x64x82xf32, #tpu.memory_space<vmem>>, vector<1x64x32xf32>
    %46 = vector.shape_cast %45 : vector<1x64x32xf32> to vector<64x32xf32>
    %c1_31 = arith.constant 1 : index
    %c0_32 = arith.constant 0 : index
    %c81_33 = arith.constant 81 : index
    %47 = vector.load %arg5[%c1_31, %c0_32, %c81_33] : memref<2x64x82xf32, #tpu.memory_space<vmem>>, vector<1x64x1xf32>
    %48 = vector.shape_cast %47 : vector<1x64x1xf32> to vector<64x1xf32>
    %49 = tpu.concatenate %39, %7 in 0 : vector<32x64xf32>, vector<16x64xf32> -> vector<48x64xf32>
    %cst_34 = arith.constant dense<0.000000e+00> : vector<64x64xf32>
    %50 = tpu.matmul %42, %49, %cst_34 {dimension_numbers = #tpu.dot_dimension_numbers<[1], [0], [0], [1], [0, 0, 1, 1], [], []>} : vector<64x48xf32>, vector<48x64xf32>, vector<64x64xf32> -> vector<64x64xf32>
    %51 = vector.broadcast %44 : vector<64x1xf32> to vector<64x64xf32>
    %52 = arith.addf %50, %51 : vector<64x64xf32>
    %53 = vector.extract_strided_slice %52 {offsets = [0, 0], sizes = [32, 64], strides = [1, 1]} : vector<64x64xf32> to vector<32x64xf32>
    %54 = math.tanh %53 : vector<32x64xf32>
    %55 = vector.extract_strided_slice %52 {offsets = [32, 0], sizes = [32, 64], strides = [1, 1]} : vector<64x64xf32> to vector<32x64xf32>
    %56 = arith.negf %55 : vector<32x64xf32>
    %57 = math.exp %56 : vector<32x64xf32>
    %cst_35 = arith.constant 1.000000e+00 : f32
    %58 = vector.broadcast %cst_35 : f32 to vector<32x64xf32>
    %59 = arith.addf %58, %57 : vector<32x64xf32>
    %60 = arith.divf %58, %59 : vector<32x64xf32>
    %61 = arith.mulf %54, %60 : vector<32x64xf32>
    %cst_36 = arith.constant dense<0.000000e+00> : vector<64x64xf32>
    %62 = tpu.matmul %46, %61, %cst_36 {dimension_numbers = #tpu.dot_dimension_numbers<[1], [0], [0], [1], [0, 0, 1, 1], [], []>} : vector<64x32xf32>, vector<32x64xf32>, vector<64x64xf32> -> vector<64x64xf32>
    %63 = vector.broadcast %48 : vector<64x1xf32> to vector<64x64xf32>
    %64 = arith.addf %62, %63 : vector<64x64xf32>
    %65 = vector.extract_strided_slice %64 {offsets = [32, 0], sizes = [32, 64], strides = [1, 1]} : vector<64x64xf32> to vector<32x64xf32>
    %66 = arith.addf %40, %65 : vector<32x64xf32>
    %c0_37 = arith.constant 0 : index
    %c0_38 = arith.constant 0 : index
    %67 = vector.load %arg6[%c0_37, %c0_38] : memref<14x33xf32, #tpu.memory_space<vmem>>, vector<14x32xf32>
    %cst_39 = arith.constant dense<0.000000e+00> : vector<14x64xf32>
    %68 = tpu.matmul %67, %66, %cst_39 {dimension_numbers = #tpu.dot_dimension_numbers<[1], [0], [0], [1], [0, 0, 1, 1], [], []>} : vector<14x32xf32>, vector<32x64xf32>, vector<14x64xf32> -> vector<14x64xf32>
    %c0_40 = arith.constant 0 : index
    %c32 = arith.constant 32 : index
    %69 = vector.load %arg6[%c0_40, %c32] : memref<14x33xf32, #tpu.memory_space<vmem>>, vector<14x1xf32>
    %70 = vector.broadcast %69 : vector<14x1xf32> to vector<14x64xf32>
    %71 = arith.addf %68, %70 : vector<14x64xf32>
    %72 = vector.extract_strided_slice %71 {offsets = [0, 0], sizes = [7, 64], strides = [1, 1]} : vector<14x64xf32> to vector<7x64xf32>
    %73 = vector.extract_strided_slice %71 {offsets = [7, 0], sizes = [7, 64], strides = [1, 1]} : vector<14x64xf32> to vector<7x64xf32>
    %74 = vector.extract_strided_slice %1 {offsets = [0, 0], sizes = [1, 64], strides = [1, 1]} : vector<8x64xf32> to vector<1x64xf32>
    %75 = vector.extract_strided_slice %1 {offsets = [1, 0], sizes = [7, 64], strides = [1, 1]} : vector<8x64xf32> to vector<7x64xf32>
    %76 = math.exp %72 : vector<7x64xf32>
    %77 = arith.mulf %75, %76 : vector<7x64xf32>
    %78 = arith.addf %77, %73 : vector<7x64xf32>
    %79 = tpu.concatenate %74, %78 in 0 : vector<1x64xf32>, vector<7x64xf32> -> vector<8x64xf32>
    %c0_41 = arith.constant 0 : index
    %c0_42 = arith.constant 0 : index
    %c0_43 = arith.constant 0 : index
    %80 = vector.load %arg7[%c0_41, %c0_42, %c0_43] : memref<1x8x64xf32, #tpu.memory_space<vmem>>, vector<1x8x64xf32>
    %81 = vector.shape_cast %80 : vector<1x8x64xf32> to vector<8x64xf32>
    %82 = vector.shape_cast %79 : vector<8x64xf32> to vector<1x8x64xf32>
    tpu.vector_store %arg7[%c0_41, %c0_42, %c0_43], %82 {strides = array<i32>} : memref<1x8x64xf32, #tpu.memory_space<vmem>>, vector<1x8x64xf32>,
    %c0_44 = arith.constant 0 : index
    %c0_45 = arith.constant 0 : index
    %c0_46 = arith.constant 0 : index
    %83 = vector.load %arg8[%c0_44, %c0_45, %c0_46] : memref<1x7x64xf32, #tpu.memory_space<vmem>>, vector<1x7x64xf32>
    %84 = vector.shape_cast %83 : vector<1x7x64xf32> to vector<7x64xf32>
    %85 = vector.shape_cast %72 : vector<7x64xf32> to vector<1x7x64xf32>
    tpu.vector_store %arg8[%c0_44, %c0_45, %c0_46], %85 {strides = array<i32>} : memref<1x7x64xf32, #tpu.memory_space<vmem>>, vector<1x7x64xf32>,
    return
  }
  func.func @transform_0(%arg0: i32) -> (i32, i32, i32) {
    %c0_i32 = arith.constant 0 : i32
    %c0_i32_0 = arith.constant 0 : i32
    %c0_i32_1 = arith.constant 0 : i32
    return %arg0, %c0_i32, %c0_i32_0 : i32, i32, i32
  }
  func.func @transform_1(%arg0: i32) -> (i32, i32, i32) {
    %c0_i32 = arith.constant 0 : i32
    %c0_i32_0 = arith.constant 0 : i32
    %c0_i32_1 = arith.constant 0 : i32
    return %arg0, %c0_i32, %c0_i32_0 : i32, i32, i32
  }
  func.func @transform_2(%arg0: i32) -> (i32, i32, i32) {
    %c0_i32 = arith.constant 0 : i32
    %c0_i32_0 = arith.constant 0 : i32
    %c0_i32_1 = arith.constant 0 : i32
    return %arg0, %c0_i32, %c0_i32_0 : i32, i32, i32
  }
  func.func @transform_3(%arg0: i32) -> (i32, i32) {
    %c0_i32 = arith.constant 0 : i32
    %c0_i32_0 = arith.constant 0 : i32
    %c0_i32_1 = arith.constant 0 : i32
    return %c0_i32, %c0_i32_0 : i32, i32
  }
  func.func @transform_4(%arg0: i32) -> (i32, i32, i32) {
    %c0_i32 = arith.constant 0 : i32
    %c0_i32_0 = arith.constant 0 : i32
    %c0_i32_1 = arith.constant 0 : i32
    %c0_i32_2 = arith.constant 0 : i32
    return %c0_i32, %c0_i32_0, %c0_i32_1 : i32, i32, i32
  }
  func.func @transform_5(%arg0: i32) -> (i32, i32) {
    %c0_i32 = arith.constant 0 : i32
    %c0_i32_0 = arith.constant 0 : i32
    %c0_i32_1 = arith.constant 0 : i32
    return %c0_i32, %c0_i32_0 : i32, i32
  }
  func.func @transform_6(%arg0: i32) -> (i32, i32, i32) {
    %c0_i32 = arith.constant 0 : i32
    %c0_i32_0 = arith.constant 0 : i32
    %c0_i32_1 = arith.constant 0 : i32
    return %arg0, %c0_i32, %c0_i32_0 : i32, i32, i32
  }
  func.func @transform_7(%arg0: i32) -> (i32, i32, i32) {
    %c0_i32 = arith.constant 0 : i32
    %c0_i32_0 = arith.constant 0 : i32
    %c0_i32_1 = arith.constant 0 : i32
    return %arg0, %c0_i32, %c0_i32_0 : i32, i32, i32
  }
}

</mosaic_0001>

<llo_original>
// kernel: tpu_custom_call.1
$region0: #{tpu_custom_call.1}
  #allocation0 [shape = 'u32[]', space=smem, size = 0x4, offset = 0x4, fixed_abs, tag = 'smem constant byte address 0x4 - core index']
  #allocation1 [shape = 'u32[144,128]{1,0:T(1,128)}', space=vmem, size = 0x12000, scoped, tag = 'internal scratch']
  %s0 = inlined_call_operand.vmem [shape: f32[2,8,64], index: 0, kind: input, shape index: {}]
  %s1 = inlined_call_operand.vmem [shape: f32[2,16,64], index: 1, kind: input, shape index: {}]
  %s2 = inlined_call_operand.vmem [shape: f32[2,16,1], index: 2, kind: input, shape index: {}]
  %s3 = inlined_call_operand.vmem [shape: f32[32,8], index: 3, kind: input, shape index: {}]
  %s4 = inlined_call_operand.hbm [shape: f32[2,64,82], index: 4, kind: input, shape index: {}]
  %s5 = inlined_call_operand.vmem [shape: f32[14,33], index: 5, kind: input, shape index: {}]
  %s6 = inlined_call_operand.hbm [shape: f32[2,8,64], index: 6, kind: output, shape index: {0}]
  %s7 = inlined_call_operand.vmem [shape: f32[2,7,64], index: 7, kind: output, shape index: {1}]
  %8 = xla_tuple %s6, %s7
  %s9 = sld [smem:[#allocation0]]
  $region69: #{tpu_custom_call.1} parent=0
    _
  %s11 = ssub.s32 1, %s9
  %s12 = scalar_select 0, %s11, %s9
  $region1: #{tpu_custom_call.1} parent=0
    #allocation2 [shape = 'u8[65536]{0}', space=vmem, size = 0x10000, scoped, tag = 'input window, operand 4, single buffered']
    #allocation3 [shape = 's32[2]{0}', space=sflag, size = 0x8, scoped, tag = 'scoped memory for tpu_custom_call.1']
    #allocation4 [shape = 's32[2]{0}', space=sflag, size = 0x8, scoped, tag = 'scoped memory for tpu_custom_call.1']
    #allocation5 [shape = 'u8[8192]{0}', space=vmem, size = 0x2000, scoped, tag = 'output window, operand 0']
    %13 = vsyncpa [#allocation3], 0
    %14 = vsyncpa [#allocation4], 0
    %s15 = scalar_lea.sflag [#allocation4], 1
    %16 = vsyncpa %s15, 0
    loop: start=0, step=1, limit=4
    $region2: #{tpu_custom_call.1} parent=1 // loop_pre_header
      _
    $region3: #{tpu_custom_call.1} parent=1 // loop_header
      %s18 = sphi 0, %s22
      %p19 = scmp.ge.s32.totalorder %s18, 4
      %s28 = sphi 0, %s30
      %s31 = sphi 0, %s28
      %s32 = sphi 0, %s31
      %s48 = sphi 0, %s32
      %s54 = sphi 0, %s56
      %s57 = sphi 0, %s54
      %s58 = sphi 0, %s57
      %s74 = sphi 0, %s58
      %s80 = sphi 0, %s82
      %s83 = sphi 0, %s80
      %s84 = sphi 0, %s83
      %s100 = sphi 0, %s84
      %s104 = sphi 0, %s104
      %s106 = sphi 0, %s104
      %s107 = sphi 0, %s106
      %s121 = sphi 0, %s107
      %s125 = sphi 0, %s125
      %s127 = sphi 0, %s125
      %s128 = sphi 0, %s127
      %s142 = sphi 0, %s128
      %s146 = sphi 0, %s146
      %s148 = sphi 0, %s146
      %s149 = sphi 0, %s148
      %s163 = sphi 0, %s149
      %s169 = sphi 0, %s171
      %s172 = sphi 0, %s169
      %s173 = sphi 0, %s172
      %s189 = sphi 0, %s173
      %s195 = sphi 0, %s197
      %s198 = sphi 0, %s195
      %s199 = sphi 0, %s198
      %s215 = sphi 0, %s199
    $region4: #{tpu_custom_call.1} parent=1 // loop_header_branch
      %21 = sbr.rel (%p19) target = $region8
    $region5: #{tpu_custom_call.1} parent=1 // loop_body
      %s23 = ssub.s32 %s18, 1
      %s24 = ssub.s32 %s18, 2
      %s25 = sadd.s32 %s18, 1
      %s26 = ssub.s32 %s18, %s25
      %p27 = scmp.eq.s32.totalorder %s26, 0
      %s29 = sadd.s32 %s28, 1
      %s30 = scalar_select %p27, %s28, %s29
      %p33 = pneg %p27
      %p34 = scmp.eq.s32.totalorder %s18, 1
      %p35 = por %p33, %p34
      %p36 = scmp.ne.s32.totalorder %s28, %s31
      %p37 = scmp.eq.s32.totalorder %s18, 0
      %p38 = por %p36, %p37
      %p39 = scmp.ne.s32.totalorder %s28, %s31
      %p40 = scmp.eq.s32.totalorder %s23, 1
      %p41 = por %p39, %p40
      %p42 = scmp.ne.s32.totalorder %s31, %s32
      %p43 = scmp.eq.s32.totalorder %s23, 0
      %p44 = por %p42, %p43
      %p45 = scmp.ne.s32.totalorder %s31, %s32
      %p46 = scmp.eq.s32.totalorder %s24, 1
      %p47 = por %p45, %p46
      %p49 = scmp.ne.s32.totalorder %s32, %s48
      %p50 = scmp.eq.s32.totalorder %s24, 0
      %p51 = por %p49, %p50
      %s52 = ssub.s32 %s18, %s25
      %p53 = scmp.eq.s32.totalorder %s52, 0
      %s55 = sadd.s32 %s54, 1
      %s56 = scalar_select %p53, %s54, %s55
      %p59 = pneg %p53
      %p60 = scmp.eq.s32.totalorder %s18, 1
      %p61 = por %p59, %p60
      %p62 = scmp.ne.s32.totalorder %s54, %s57
      %p63 = scmp.eq.s32.totalorder %s18, 0
      %p64 = por %p62, %p63
      %p65 = scmp.ne.s32.totalorder %s54, %s57
      %p66 = scmp.eq.s32.totalorder %s23, 1
      %p67 = por %p65, %p66
      %p68 = scmp.ne.s32.totalorder %s57, %s58
      %p69 = scmp.eq.s32.totalorder %s23, 0
      %p70 = por %p68, %p69
      %p71 = scmp.ne.s32.totalorder %s57, %s58
      %p72 = scmp.eq.s32.totalorder %s24, 1
      %p73 = por %p71, %p72
      %p75 = scmp.ne.s32.totalorder %s58, %s74
      %p76 = scmp.eq.s32.totalorder %s24, 0
      %p77 = por %p75, %p76
      %s78 = ssub.s32 %s18, %s25
      %p79 = scmp.eq.s32.totalorder %s78, 0
      %s81 = sadd.s32 %s80, 1
      %s82 = scalar_select %p79, %s80, %s81
      %p85 = pneg %p79
      %p86 = scmp.eq.s32.totalorder %s18, 1
      %p87 = por %p85, %p86
      %p88 = scmp.ne.s32.totalorder %s80, %s83
      %p89 = scmp.eq.s32.totalorder %s18, 0
      %p90 = por %p88, %p89
      %p91 = scmp.ne.s32.totalorder %s80, %s83
      %p92 = scmp.eq.s32.totalorder %s23, 1
      %p93 = por %p91, %p92
      %p94 = scmp.ne.s32.totalorder %s83, %s84
      %p95 = scmp.eq.s32.totalorder %s23, 0
      %p96 = por %p94, %p95
      %p97 = scmp.ne.s32.totalorder %s83, %s84
      %p98 = scmp.eq.s32.totalorder %s24, 1
      %p99 = por %p97, %p98
      %p101 = scmp.ne.s32.totalorder %s84, %s100
      %p102 = scmp.eq.s32.totalorder %s24, 0
      %p103 = por %p101, %p102
      %s105 = sadd.s32 %s104, 1
      %p108 = scmp.eq.s32.totalorder %s18, 1
      %p109 = scmp.ne.s32.totalorder %s104, %s106
      %p110 = scmp.eq.s32.totalorder %s18, 0
      %p111 = por %p109, %p110
      %p112 = scmp.ne.s32.totalorder %s104, %s106
      %p113 = scmp.eq.s32.totalorder %s23, 1
      %p114 = por %p112, %p113
      %p115 = scmp.ne.s32.totalorder %s106, %s107
      %p116 = scmp.eq.s32.totalorder %s23, 0
      %p117 = por %p115, %p116
      %p118 = scmp.ne.s32.totalorder %s106, %s107
      %p119 = scmp.eq.s32.totalorder %s24, 1
      %p120 = por %p118, %p119
      %p122 = scmp.ne.s32.totalorder %s107, %s121
      %p123 = scmp.eq.s32.totalorder %s24, 0
      %p124 = por %p122, %p123
      %s126 = sadd.s32 %s125, 1
      %p129 = scmp.eq.s32.totalorder %s18, 1
      %p130 = scmp.ne.s32.totalorder %s125, %s127
      %p131 = scmp.eq.s32.totalorder %s18, 0
      %p132 = por %p130, %p131
      %p133 = scmp.ne.s32.totalorder %s125, %s127
      %p134 = scmp.eq.s32.totalorder %s23, 1
      %p135 = por %p133, %p134
      %p136 = scmp.ne.s32.totalorder %s127, %s128
      %p137 = scmp.eq.s32.totalorder %s23, 0
      %p138 = por %p136, %p137
      %p139 = scmp.ne.s32.totalorder %s127, %s128
      %p140 = scmp.eq.s32.totalorder %s24, 1
      %p141 = por %p139, %p140
      %p143 = scmp.ne.s32.totalorder %s128, %s142
      %p144 = scmp.eq.s32.totalorder %s24, 0
      %p145 = por %p143, %p144
      %s147 = sadd.s32 %s146, 1
      %p150 = scmp.eq.s32.totalorder %s18, 1
      %p151 = scmp.ne.s32.totalorder %s146, %s148
      %p152 = scmp.eq.s32.totalorder %s18, 0
      %p153 = por %p151, %p152
      %p154 = scmp.ne.s32.totalorder %s146, %s148
      %p155 = scmp.eq.s32.totalorder %s23, 1
      %p156 = por %p154, %p155
      %p157 = scmp.ne.s32.totalorder %s148, %s149
      %p158 = scmp.eq.s32.totalorder %s23, 0
      %p159 = por %p157, %p158
      %p160 = scmp.ne.s32.totalorder %s148, %s149
      %p161 = scmp.eq.s32.totalorder %s24, 1
      %p162 = por %p160, %p161
      %p164 = scmp.ne.s32.totalorder %s149, %s163
      %p165 = scmp.eq.s32.totalorder %s24, 0
      %p166 = por %p164, %p165
      %s167 = ssub.s32 %s18, %s25
      %p168 = scmp.eq.s32.totalorder %s167, 0
      %s170 = sadd.s32 %s169, 1
      %s171 = scalar_select %p168, %s169, %s170
      %p174 = pneg %p168
      %p175 = scmp.eq.s32.totalorder %s18, 1
      %p176 = por %p174, %p175
      %p177 = scmp.ne.s32.totalorder %s169, %s172
      %p178 = scmp.eq.s32.totalorder %s18, 0
      %p179 = por %p177, %p178
      %p180 = scmp.ne.s32.totalorder %s169, %s172
      %p181 = scmp.eq.s32.totalorder %s23, 1
      %p182 = por %p180, %p181
      %p183 = scmp.ne.s32.totalorder %s172, %s173
      %p184 = scmp.eq.s32.totalorder %s23, 0
      %p185 = por %p183, %p184
      %p186 = scmp.ne.s32.totalorder %s172, %s173
      %p187 = scmp.eq.s32.totalorder %s24, 1
      %p188 = por %p186, %p187
      %p190 = scmp.ne.s32.totalorder %s173, %s189
      %p191 = scmp.eq.s32.totalorder %s24, 0
      %p192 = por %p190, %p191
      %s193 = ssub.s32 %s18, %s25
      %p194 = scmp.eq.s32.totalorder %s193, 0
      %s196 = sadd.s32 %s195, 1
      %s197 = scalar_select %p194, %s195, %s196
      %p200 = pneg %p194
      %p201 = scmp.eq.s32.totalorder %s18, 1
      %p202 = por %p200, %p201
      %p203 = scmp.ne.s32.totalorder %s195, %s198
      %p204 = scmp.eq.s32.totalorder %s18, 0
      %p205 = por %p203, %p204
      %p206 = scmp.ne.s32.totalorder %s195, %s198
      %p207 = scmp.eq.s32.totalorder %s23, 1
      %p208 = por %p206, %p207
      %p209 = scmp.ne.s32.totalorder %s198, %s199
      %p210 = scmp.eq.s32.totalorder %s23, 0
      %p211 = por %p209, %p210
      %p212 = scmp.ne.s32.totalorder %s198, %s199
      %p213 = scmp.eq.s32.totalorder %s24, 1
      %p214 = por %p212, %p213
      %p216 = scmp.ne.s32.totalorder %s199, %s215
      %p217 = scmp.eq.s32.totalorder %s24, 0
      %p218 = por %p216, %p217
      %p219 = scmp.le.s32.totalorder 1, %s18
      %p220 = scmp.lt.s32.totalorder %s18, 3
      %p221 = pnand %p219, %p220
      %p222 = pneg %p221
      // Predicated region
      $region9: #{tpu_custom_call.1} parent=5 // pred_check
        _
      $region10: #{tpu_custom_call.1} parent=5 // pred_check_branch
        %224 = sbr.rel (%p221) target = $region12
      $region11: #{tpu_custom_call.1} parent=5 // pred_region
        %s225 = ssub.s32 %s18, 1
        // Predicated region
        $region13: #{tpu_custom_call.1} parent=11 // pred_check
          %p226 = pneg %p117
        $region14: #{tpu_custom_call.1} parent=11 // pred_check_branch
          %228 = sbr.rel (%p226) target = $region16
        $region15: #{tpu_custom_call.1} parent=11 // pred_region
          _
        $region16: #{tpu_custom_call.1} parent=11 // pred_fallthru
          _
        // Predicated region
        $region17: #{tpu_custom_call.1} parent=11 // pred_check
          %p229 = pneg %p138
        $region18: #{tpu_custom_call.1} parent=11 // pred_check_branch
          %231 = sbr.rel (%p229) target = $region20
        $region19: #{tpu_custom_call.1} parent=11 // pred_region
          %s233 = ssub.s32 2048, 2048
          %234 = vsyncadd [#allocation3], %s233
          %s235 = sshll.u32 [#allocation2], 4
          %s236 = int_to_ptr.vmem [resolvable:$true] %s235
          %241 = dma.hbm_to_vmem [thread:$0]  %s4, 2048, %s236, [#allocation3], 128, 128, 8
        $region20: #{tpu_custom_call.1} parent=11 // pred_fallthru
          _
        // Predicated region
        $region21: #{tpu_custom_call.1} parent=11 // pred_check
          %p242 = pneg %p159
        $region22: #{tpu_custom_call.1} parent=11 // pred_check_branch
          %244 = sbr.rel (%p242) target = $region24
        $region23: #{tpu_custom_call.1} parent=11 // pred_region
          _
        $region24: #{tpu_custom_call.1} parent=11 // pred_fallthru
          _
      $region12: #{tpu_custom_call.1} parent=5 // pred_fallthru
        _
      %p245 = scmp.lt.s32.totalorder %s18, 2
      // Predicated region
      $region25: #{tpu_custom_call.1} parent=5 // pred_check
        %p246 = pneg %p245
      $region26: #{tpu_custom_call.1} parent=5 // pred_check_branch
        %248 = sbr.rel (%p246) target = $region28
      $region27: #{tpu_custom_call.1} parent=5 // pred_region
        // Predicated region
        $region29: #{tpu_custom_call.1} parent=27 // pred_check
          %p249 = pneg %p38
        $region30: #{tpu_custom_call.1} parent=27 // pred_check_branch
          %251 = sbr.rel (%p249) target = $region32
        $region31: #{tpu_custom_call.1} parent=27 // pred_region
          %p252 = scmp.lt.s32.totalorder %s18, 1
          %s253 = scalar_select %p252, %s18, 1
          %s254 = smul.addr %s253, 8
          %s255 = scalar_lea.vmem %s0, %s254
        $region32: #{tpu_custom_call.1} parent=27 // pred_fallthru
          _
        // Predicated region
        $region33: #{tpu_custom_call.1} parent=27 // pred_check
          %p256 = pneg %p64
        $region34: #{tpu_custom_call.1} parent=27 // pred_check_branch
          %258 = sbr.rel (%p256) target = $region36
        $region35: #{tpu_custom_call.1} parent=27 // pred_region
          %p259 = scmp.lt.s32.totalorder %s18, 1
          %s260 = scalar_select %p259, %s18, 1
          %s261 = smul.addr %s260, 2
          %s262 = smul.addr %s261, 8
          %s263 = scalar_lea.vmem %s1, %s262
        $region36: #{tpu_custom_call.1} parent=27 // pred_fallthru
          _
        // Predicated region
        $region37: #{tpu_custom_call.1} parent=27 // pred_check
          %p264 = pneg %p90
        $region38: #{tpu_custom_call.1} parent=27 // pred_check_branch
          %266 = sbr.rel (%p264) target = $region40
        $region39: #{tpu_custom_call.1} parent=27 // pred_region
          %p267 = scmp.lt.s32.totalorder %s18, 1
          %s268 = scalar_select %p267, %s18, 1
          %s269 = smul.addr %s268, 2
          %s270 = smul.addr %s269, 8
          %s271 = scalar_lea.vmem %s2, %s270
        $region40: #{tpu_custom_call.1} parent=27 // pred_fallthru
          _
      $region28: #{tpu_custom_call.1} parent=5 // pred_fallthru
        _
      %p272 = scmp.le.s32.totalorder 1, %s18
      %p273 = scmp.lt.s32.totalorder %s18, 3
      %p274 = pnand %p272, %p273
      %p275 = pneg %p274
      // Predicated region
      $region41: #{tpu_custom_call.1} parent=5 // pred_check
        _
      $region42: #{tpu_custom_call.1} parent=5 // pred_check_branch
        %277 = sbr.rel (%p274) target = $region44
      $region43: #{tpu_custom_call.1} parent=5 // pred_region
        %s278 = ssub.s32 %s18, 1
        // Predicated region
        $region45: #{tpu_custom_call.1} parent=43 // pred_check
          %p279 = pneg %p138
        $region46: #{tpu_custom_call.1} parent=43 // pred_check_branch
          %281 = sbr.rel (%p279) target = $region48
        $region47: #{tpu_custom_call.1} parent=43 // pred_region
          %282 = dma.done [#allocation3], 2048
        $region48: #{tpu_custom_call.1} parent=43 // pred_fallthru
          _
        %p283 = scmp.lt.s32.totalorder %s23, 1
        %s284 = scalar_select %p283, %s23, 1
        %s285 = smul.addr %s284, 8
        %s286 = scalar_lea.vmem %s0, %s285
        %p287 = pneg %p44
        %p288 = pneg %p41
        %p289 = scmp.lt.s32.totalorder %s23, 1
        %s290 = scalar_select %p289, %s23, 1
        %s291 = smul.addr %s290, 2
        %s292 = smul.addr %s291, 8
        %s293 = scalar_lea.vmem %s1, %s292
        %p294 = pneg %p70
        %p295 = pneg %p67
        %p296 = scmp.lt.s32.totalorder %s23, 1
        %s297 = scalar_select %p296, %s23, 1
        %s298 = smul.addr %s297, 2
        %s299 = smul.addr %s298, 8
        %s300 = scalar_lea.vmem %s2, %s299
        %p301 = pneg %p96
        %p302 = pneg %p93
        %p303 = pneg %p117
        %p304 = pneg %p114
        %p305 = pneg %p138
        %p306 = pneg %p135
        %p307 = pneg %p159
        %p308 = pneg %p156
        %p309 = pneg %p185
        %p310 = pneg %p182
        %s311 = sand.u32 %s172, 1
        %s312 = scalar_lea.sflag [#allocation4], %s311
        %s313 = sand.u32 %s172, 1
        %s314 = smul.addr %s313, 8
        %s315 = scalar_lea.vmem [#allocation5], %s314
        %p316 = pneg %p211
        %p317 = pneg %p208
        %p318 = scmp.lt.s32.totalorder %s23, 1
        %s319 = scalar_select %p318, %s23, 1
        %s320 = smul.addr %s319, 8
        %s321 = scalar_lea.vmem %s7, %s320
        %p322 = scmp.lt.s32.totalorder %s23, 1
        %s323 = scalar_select %p322, %s23, 1
        %s324 = smul.addr %s323, 8
        %s325 = scalar_lea.vmem %s0, %s324
        %p326 = scmp.lt.s32.totalorder %s23, 1
        %s327 = scalar_select %p326, %s23, 1
        %s328 = smul.addr %s327, 2
        %s329 = smul.addr %s328, 8
        %s330 = scalar_lea.vmem %s1, %s329
        %p331 = scmp.lt.s32.totalorder %s23, 1
        %s332 = scalar_select %p331, %s23, 1
        %s333 = smul.addr %s332, 2
        %s334 = smul.addr %s333, 8
        %s335 = scalar_lea.vmem %s2, %s334
        %p336 = scmp.lt.s32.totalorder %s23, 1
        %s337 = scalar_select %p336, %s23, 1
        %s338 = smul.addr %s337, 8
        %s339 = scalar_lea.vmem %s7, %s338
        %v340 = vld [vmem:[%s325] sm:$0xff]
        %v341 = vld [vmem:[%s330] sm:$0xff]
        %v342 = vld [vmem:[%s330 + $0x8] sm:$0xff]
        %v343 = vld [vmem:[%s335] sm:$0xff]
        %v344 = vld [vmem:[%s335 + $0x8] sm:$0xff]
        %346 = vset.pattern.permute.xlu0 0
        %347 = vperm.xlu0 %346, %v343
        %v348 = vpop.permute.xlu0 %347
        %351 = vset.pattern.permute.xlu0 0
        %352 = vperm.xlu0 %351, %v344
        %v353 = vpop.permute.xlu0 %352
        %v355 = vadd.f32 %v341, %v348
        %v356 = vadd.f32 %v342, %v353
        %v357 = vld [vmem:[%s3] sm:$0xff]
        %v358 = vld [vmem:[%s3 + $0x8] sm:$0xff]
        %v359 = vld [vmem:[%s3 + $0x10] sm:$0xff]
        %v360 = vld [vmem:[%s3 + $0x18] sm:$0xff]
        %362 = vset.pattern.permute.xlu0 7
        %363 = vperm.xlu0 %362, %v357
        %v364 = vpop.permute.xlu0 %363
        %367 = vset.pattern.permute.xlu0 7
        %368 = vperm.xlu0 %367, %v358
        %v369 = vpop.permute.xlu0 %368
        %372 = vset.pattern.permute.xlu0 7
        %373 = vperm.xlu0 %372, %v359
        %v374 = vpop.permute.xlu0 %373
        %377 = vset.pattern.permute.xlu0 7
        %378 = vperm.xlu0 %377, %v360
        %v379 = vpop.permute.xlu0 %378
        %vm381 = vcmask 56320
        %v382 = vsel %vm381, %v357, 0
        %v384 = vsel %vm381, %v358, 0
        %v386 = vsel %vm381, %v359, 0
        %v388 = vsel %vm381, %v360, 0
        %vm390 = vcmask 1046528
        %v392 = vsel %vm390, %v340, 0
        %394 = vmatprep.subr.mxu0 0.0
        %395 = vmatpush1.msra.mxu0 %v392
        %396 = vmatprep.subr.mxu0 0.0
        %397 = vmatpush1.msra.mxu0 0.0
        %398 = vmatprep.subr.mxu0 0.0
        %399 = vmatpush1.msra.mxu0 0.0
        %400 = vmatprep.subr.mxu0 0.0
        %401 = vmatpush1.msra.mxu0 0.0
        %402 = vmatprep.subr.mxu0 0.0
        %403 = vmatpush1.msra.mxu0 0.0
        %404 = vmatprep.subr.mxu0 0.0
        %405 = vmatpush1.msra.mxu0 0.0
        %406 = vmatprep.subr.mxu0 0.0
        %407 = vmatpush1.msra.mxu0 0.0
        %408 = vmatprep.subr.mxu0 0.0
        %409 = vmatpush1.msra.mxu0 0.0
        %410 = vmatprep.subr.mxu0 0.0
        %411 = vmatpush1.msra.mxu0 0.0
        %412 = vmatprep.subr.mxu0 0.0
        %413 = vmatpush1.msra.mxu0 0.0
        %414 = vmatprep.subr.mxu0 0.0
        %415 = vmatpush1.msra.mxu0 0.0
        %416 = vmatprep.subr.mxu0 0.0
        %417 = vmatpush1.msra.mxu0 0.0
        %418 = vmatprep.subr.mxu0 0.0
        %419 = vmatpush1.msra.mxu0 0.0
        %420 = vmatprep.subr.mxu0 0.0
        %421 = vmatpush1.msra.mxu0 0.0
        %422 = vmatprep.subr.mxu0 0.0
        %423 = vmatpush1.msra.mxu0 0.0
        %424 = vmatprep.subr.mxu0 0.0
        %425 = vmatpush1.msra.mxu0 0.0
        %426 = vmatprep.subr.mxu0 0.0
        %427 = vmatpush1.msra.mxu0 0.0
        %428 = vmatprep.subr.mxu0 0.0
        %429 = vmatpush1.msra.mxu0 0.0
        %430 = vmatprep.subr.mxu0 0.0
        %431 = vmatpush1.msra.mxu0 0.0
        %432 = vmatprep.subr.mxu0 0.0
        %433 = vmatpush1.msra.mxu0 0.0
        %434 = vmatprep.subr.mxu0 0.0
        %435 = vmatpush1.msra.mxu0 0.0
        %436 = vmatprep.subr.mxu0 0.0
        %437 = vmatpush1.msra.mxu0 0.0
        %438 = vmatprep.subr.mxu0 0.0
        %439 = vmatpush1.msra.mxu0 0.0
        %440 = vmatprep.subr.mxu0 0.0
        %441 = vmatpush1.msra.mxu0 0.0
        %442 = vmatprep.subr.mxu0 0.0
        %443 = vmatpush1.msra.mxu0 0.0
        %444 = vmatprep.subr.mxu0 0.0
        %445 = vmatpush1.msra.mxu0 0.0
        %446 = vmatprep.subr.mxu0 0.0
        %447 = vmatpush1.msra.mxu0 0.0
        %448 = vmatprep.subr.mxu0 0.0
        %449 = vmatpush1.msra.mxu0 0.0
        %450 = vmatprep.subr.mxu0 0.0
        %451 = vmatpush1.msra.mxu0 0.0
        %452 = vmatprep.subr.mxu0 0.0
        %453 = vmatpush1.msra.mxu0 0.0
        %454 = vmatprep.subr.mxu0 0.0
        %455 = vmatpush1.msra.mxu0 0.0
        %456 = vmatprep.subr.mxu0 0.0
        %457 = vmatpush1.msra.mxu0 0.0
        %458 = vmatprep.mubr.f32.mxu0 0.0
        %459 = vmatmul.mubr.f32.gmra.mrb[0].mxu0 %v382
        %v460 = vpop.f32.mrb[0].mxu0
        %v461 = vadd.f32 %v364, %v460
        %v462 = vpop.f32.mrb[0].mxu0
        %463 = vmatprep.mubr.f32.mxu0 0.0
        %464 = vmatmul.mubr.f32.gmra.mrb[0].mxu0 %v384
        %v465 = vpop.f32.mrb[0].mxu0
        %v466 = vadd.f32 %v369, %v465
        %v467 = vpop.f32.mrb[0].mxu0
        %468 = vmatprep.mubr.f32.mxu0 0.0
        %469 = vmatmul.mubr.f32.gmra.mrb[0].mxu0 %v386
        %v470 = vpop.f32.mrb[0].mxu0
        %v471 = vadd.f32 %v374, %v470
        %v472 = vpop.f32.mrb[0].mxu0
        %473 = vmatprep.mubr.f32.mxu0 0.0
        %474 = vmatmul.mubr.f32.gmra.mrb[0].mxu0 %v388
        %v475 = vpop.f32.mrb[0].mxu0
        %v476 = vadd.f32 %v379, %v475
        %v477 = vpop.f32.mrb[0].mxu0
        %478 = vdwg.mxu0
        %v479 = vld [vmem:[#allocation2] sm:$0xff]
        %v480 = vld [vmem:[#allocation2 + $0x8] sm:$0xff]
        %v481 = vld [vmem:[#allocation2 + $0x10] sm:$0xff]
        %v482 = vld [vmem:[#allocation2 + $0x18] sm:$0xff]
        %v483 = vld [vmem:[#allocation2 + $0x20] sm:$0xff]
        %v484 = vld [vmem:[#allocation2 + $0x28] sm:$0xff]
        %v485 = vld [vmem:[#allocation2 + $0x30] sm:$0xff]
        %v486 = vld [vmem:[#allocation2 + $0x38] sm:$0xff]
        %488 = vset.pattern.permute.xlu0 48
        %489 = vperm.xlu0 %488, %v479
        %v490 = vpop.permute.xlu0 %489
        %493 = vset.pattern.permute.xlu0 48
        %494 = vperm.xlu0 %493, %v480
        %v495 = vpop.permute.xlu0 %494
        %498 = vset.pattern.permute.xlu0 48
        %499 = vperm.xlu0 %498, %v481
        %v500 = vpop.permute.xlu0 %499
        %503 = vset.pattern.permute.xlu0 48
        %504 = vperm.xlu0 %503, %v482
        %v505 = vpop.permute.xlu0 %504
        %508 = vset.pattern.permute.xlu0 48
        %509 = vperm.xlu0 %508, %v483
        %v510 = vpop.permute.xlu0 %509
        %513 = vset.pattern.permute.xlu0 48
        %514 = vperm.xlu0 %513, %v484
        %v515 = vpop.permute.xlu0 %514
        %518 = vset.pattern.permute.xlu0 48
        %519 = vperm.xlu0 %518, %v485
        %v520 = vpop.permute.xlu0 %519
        %523 = vset.pattern.permute.xlu0 48
        %524 = vperm.xlu0 %523, %v486
        %v525 = vpop.permute.xlu0 %524
        %vm527 = vcmask 392192
        %v528 = vsel %vm527, %v479, 0
        %v530 = vsel %vm527, %v480, 0
        %v532 = vsel %vm527, %v481, 0
        %v534 = vsel %vm527, %v482, 0
        %v536 = vsel %vm527, %v483, 0
        %v538 = vsel %vm527, %v484, 0
        %v540 = vsel %vm527, %v485, 0
        %v542 = vsel %vm527, %v486, 0
        %544 = vmatprep.subr.mxu0 0.0
        %545 = vmatpush1.msra.mxu0 %v461
        %546 = vmatprep.subr.mxu0 0.0
        %547 = vmatpush1.msra.mxu0 %v466
        %548 = vmatprep.subr.mxu0 0.0
        %549 = vmatpush1.msra.mxu0 %v471
        %550 = vmatprep.subr.mxu0 0.0
        %551 = vmatpush1.msra.mxu0 %v476
        %552 = vmatprep.subr.mxu0 0.0
        %553 = vmatpush1.msra.mxu0 %v355
        %554 = vmatprep.subr.mxu0 0.0
        %555 = vmatpush1.msra.mxu0 %v356
        %556 = vmatprep.subr.mxu0 0.0
        %557 = vmatpush1.msra.mxu0 0.0
        %558 = vmatprep.subr.mxu0 0.0
        %559 = vmatpush1.msra.mxu0 0.0
        %560 = vmatprep.subr.mxu0 0.0
        %561 = vmatpush1.msra.mxu0 0.0
        %562 = vmatprep.subr.mxu0 0.0
        %563 = vmatpush1.msra.mxu0 0.0
        %564 = vmatprep.subr.mxu0 0.0
        %565 = vmatpush1.msra.mxu0 0.0
        %566 = vmatprep.subr.mxu0 0.0
        %567 = vmatpush1.msra.mxu0 0.0
        %568 = vmatprep.subr.mxu0 0.0
        %569 = vmatpush1.msra.mxu0 0.0
        %570 = vmatprep.subr.mxu0 0.0
        %571 = vmatpush1.msra.mxu0 0.0
        %572 = vmatprep.subr.mxu0 0.0
        %573 = vmatpush1.msra.mxu0 0.0
        %574 = vmatprep.subr.mxu0 0.0
        %575 = vmatpush1.msra.mxu0 0.0
        %576 = vmatprep.subr.mxu0 0.0
        %577 = vmatpush1.msra.mxu0 0.0
        %578 = vmatprep.subr.mxu0 0.0
        %579 = vmatpush1.msra.mxu0 0.0
        %580 = vmatprep.subr.mxu0 0.0
        %581 = vmatpush1.msra.mxu0 0.0
        %582 = vmatprep.subr.mxu0 0.0
        %583 = vmatpush1.msra.mxu0 0.0
        %584 = vmatprep.subr.mxu0 0.0
        %585 = vmatpush1.msra.mxu0 0.0
        %586 = vmatprep.subr.mxu0 0.0
        %587 = vmatpush1.msra.mxu0 0.0
        %588 = vmatprep.subr.mxu0 0.0
        %589 = vmatpush1.msra.mxu0 0.0
        %590 = vmatprep.subr.mxu0 0.0
        %591 = vmatpush1.msra.mxu0 0.0
        %592 = vmatprep.subr.mxu0 0.0
        %593 = vmatpush1.msra.mxu0 0.0
        %594 = vmatprep.subr.mxu0 0.0
        %595 = vmatpush1.msra.mxu0 0.0
        %596 = vmatprep.subr.mxu0 0.0
        %597 = vmatpush1.msra.mxu0 0.0
        %598 = vmatprep.subr.mxu0 0.0
        %599 = vmatpush1.msra.mxu0 0.0
        %600 = vmatprep.subr.mxu0 0.0
        %601 = vmatpush1.msra.mxu0 0.0
        %602 = vmatprep.subr.mxu0 0.0
        %603 = vmatpush1.msra.mxu0 0.0
        %604 = vmatprep.subr.mxu0 0.0
        %605 = vmatpush1.msra.mxu0 0.0
        %606 = vmatprep.subr.mxu0 0.0
        %607 = vmatpush1.msra.mxu0 0.0
        %608 = vmatprep.mubr.f32.mxu0 0.0
        %609 = vmatmul.mubr.f32.gmra.mrb[0].mxu0 %v528
        %v610 = vpop.f32.mrb[0].mxu0
        %v611 = vadd.f32 %v490, %v610
        %v612 = vpop.f32.mrb[0].mxu0
        %613 = vmatprep.mubr.f32.mxu0 0.0
        %614 = vmatmul.mubr.f32.gmra.mrb[0].mxu0 %v530
        %v615 = vpop.f32.mrb[0].mxu0
        %v616 = vadd.f32 %v495, %v615
        %v617 = vpop.f32.mrb[0].mxu0
        %618 = vmatprep.mubr.f32.mxu0 0.0
        %619 = vmatmul.mubr.f32.gmra.mrb[0].mxu0 %v532
        %v620 = vpop.f32.mrb[0].mxu0
        %v621 = vadd.f32 %v500, %v620
        %v622 = vpop.f32.mrb[0].mxu0
        %623 = vmatprep.mubr.f32.mxu0 0.0
        %624 = vmatmul.mubr.f32.gmra.mrb[0].mxu0 %v534
        %v625 = vpop.f32.mrb[0].mxu0
        %v626 = vadd.f32 %v505, %v625
        %v627 = vpop.f32.mrb[0].mxu0
        %628 = vmatprep.mubr.f32.mxu0 0.0
        %629 = vmatmul.mubr.f32.gmra.mrb[0].mxu0 %v536
        %v630 = vpop.f32.mrb[0].mxu0
        %v631 = vadd.f32 %v510, %v630
        %v632 = vpop.f32.mrb[0].mxu0
        %633 = vmatprep.mubr.f32.mxu0 0.0
        %634 = vmatmul.mubr.f32.gmra.mrb[0].mxu0 %v538
        %v635 = vpop.f32.mrb[0].mxu0
        %v636 = vadd.f32 %v515, %v635
        %v637 = vpop.f32.mrb[0].mxu0
        %638 = vmatprep.mubr.f32.mxu0 0.0
        %639 = vmatmul.mubr.f32.gmra.mrb[0].mxu0 %v540
        %v640 = vpop.f32.mrb[0].mxu0
        %v641 = vadd.f32 %v520, %v640
        %v642 = vpop.f32.mrb[0].mxu0
        %643 = vmatprep.mubr.f32.mxu0 0.0
        %644 = vmatmul.mubr.f32.gmra.mrb[0].mxu0 %v542
        %v645 = vpop.f32.mrb[0].mxu0
        %v646 = vadd.f32 %v525, %v645
        %v647 = vpop.f32.mrb[0].mxu0
        %648 = vdwg.mxu0
        %v649 = vtanh.pop %v611
        %v650 = vtanh.pop %v616
        %v651 = vtanh.pop %v621
        %v652 = vtanh.pop %v626
        %v653 = vxor.u32 %v631, 2147483648
        %v654 = vxor.u32 %v636, 2147483648
        %v655 = vxor.u32 %v641, 2147483648
        %v656 = vxor.u32 %v646, 2147483648
        %v657 = vmul.f32 %v653, 1.442695
        %v658 = vpow.pop %v657
        %v659 = vmul.f32 %v654, 1.442695
        %v660 = vpow.pop %v659
        %v661 = vmul.f32 %v655, 1.442695
        %v662 = vpow.pop %v661
        %v663 = vmul.f32 %v656, 1.442695
        %v664 = vpow.pop %v663
        %v665 = vadd.f32 %v658, 1.0
        %v666 = vadd.f32 %v660, 1.0
        %v667 = vadd.f32 %v662, 1.0
        %v668 = vadd.f32 %v664, 1.0
        %v669 = vrcp.pop %v665
        %v670 = vmul.f32 1.0, %v669
        %v671 = vrcp.pop %v666
        %v672 = vmul.f32 1.0, %v671
        %v673 = vrcp.pop %v667
        %v674 = vmul.f32 1.0, %v673
        %v675 = vrcp.pop %v668
        %v676 = vmul.f32 1.0, %v675
        %v677 = vmul.f32 %v649, %v670
        %v678 = vmul.f32 %v650, %v672
        %v679 = vmul.f32 %v651, %v674
        %v680 = vmul.f32 %v652, %v676
        %681 = vset.pattern.permute.xlu0 81
        %682 = vperm.xlu0 %681, %v479
        %v683 = vpop.permute.xlu0 %682
        %685 = vset.pattern.permute.xlu0 81
        %686 = vperm.xlu0 %685, %v480
        %v687 = vpop.permute.xlu0 %686
        %689 = vset.pattern.permute.xlu0 81
        %690 = vperm.xlu0 %689, %v481
        %v691 = vpop.permute.xlu0 %690
        %693 = vset.pattern.permute.xlu0 81
        %694 = vperm.xlu0 %693, %v482
        %v695 = vpop.permute.xlu0 %694
        %697 = vset.pattern.permute.xlu0 81
        %698 = vperm.xlu0 %697, %v483
        %v699 = vpop.permute.xlu0 %698
        %701 = vset.pattern.permute.xlu0 81
        %702 = vperm.xlu0 %701, %v484
        %v703 = vpop.permute.xlu0 %702
        %705 = vset.pattern.permute.xlu0 81
        %706 = vperm.xlu0 %705, %v485
        %v707 = vpop.permute.xlu0 %706
        %709 = vset.pattern.permute.xlu0 81
        %710 = vperm.xlu0 %709, %v486
        %v711 = vpop.permute.xlu0 %710
        %713 = vrot.lane.b32.xlu0 %v479, 79
        %v714 = vpop.permute.xlu0 %713
        %715 = vrot.lane.b32.xlu0 %v480, 79
        %v716 = vpop.permute.xlu0 %715
        %717 = vrot.lane.b32.xlu0 %v481, 79
        %v718 = vpop.permute.xlu0 %717
        %719 = vrot.lane.b32.xlu0 %v482, 79
        %v720 = vpop.permute.xlu0 %719
        %721 = vrot.lane.b32.xlu0 %v483, 79
        %v722 = vpop.permute.xlu0 %721
        %723 = vrot.lane.b32.xlu0 %v484, 79
        %v724 = vpop.permute.xlu0 %723
        %725 = vrot.lane.b32.xlu0 %v485, 79
        %v726 = vpop.permute.xlu0 %725
        %727 = vrot.lane.b32.xlu0 %v486, 79
        %v728 = vpop.permute.xlu0 %727
        %vm729 = vcmask 261120
        %v730 = vsel %vm729, %v714, 0
        %v732 = vsel %vm729, %v716, 0
        %v734 = vsel %vm729, %v718, 0
        %v736 = vsel %vm729, %v720, 0
        %v738 = vsel %vm729, %v722, 0
        %v740 = vsel %vm729, %v724, 0
        %v742 = vsel %vm729, %v726, 0
        %v744 = vsel %vm729, %v728, 0
        %746 = vmatprep.subr.mxu0 0.0
        %747 = vmatpush1.msra.mxu0 %v677
        %748 = vmatprep.subr.mxu0 0.0
        %749 = vmatpush1.msra.mxu0 %v678
        %750 = vmatprep.subr.mxu0 0.0
        %751 = vmatpush1.msra.mxu0 %v679
        %752 = vmatprep.subr.mxu0 0.0
        %753 = vmatpush1.msra.mxu0 %v680
        %754 = vmatprep.subr.mxu0 0.0
        %755 = vmatpush1.msra.mxu0 0.0
        %756 = vmatprep.subr.mxu0 0.0
        %757 = vmatpush1.msra.mxu0 0.0
        %758 = vmatprep.subr.mxu0 0.0
        %759 = vmatpush1.msra.mxu0 0.0
        %760 = vmatprep.subr.mxu0 0.0
        %761 = vmatpush1.msra.mxu0 0.0
        %762 = vmatprep.subr.mxu0 0.0
        %763 = vmatpush1.msra.mxu0 0.0
        %764 = vmatprep.subr.mxu0 0.0
        %765 = vmatpush1.msra.mxu0 0.0
        %766 = vmatprep.subr.mxu0 0.0
        %767 = vmatpush1.msra.mxu0 0.0
        %768 = vmatprep.subr.mxu0 0.0
        %769 = vmatpush1.msra.mxu0 0.0
        %770 = vmatprep.subr.mxu0 0.0
        %771 = vmatpush1.msra.mxu0 0.0
        %772 = vmatprep.subr.mxu0 0.0
        %773 = vmatpush1.msra.mxu0 0.0
        %774 = vmatprep.subr.mxu0 0.0
        %775 = vmatpush1.msra.mxu0 0.0
        %776 = vmatprep.subr.mxu0 0.0
        %777 = vmatpush1.msra.mxu0 0.0
        %778 = vmatprep.subr.mxu0 0.0
        %779 = vmatpush1.msra.mxu0 0.0
        %780 = vmatprep.subr.mxu0 0.0
        %781 = vmatpush1.msra.mxu0 0.0
        %782 = vmatprep.subr.mxu0 0.0
        %783 = vmatpush1.msra.mxu0 0.0
        %784 = vmatprep.subr.mxu0 0.0
        %785 = vmatpush1.msra.mxu0 0.0
        %786 = vmatprep.subr.mxu0 0.0
        %787 = vmatpush1.msra.mxu0 0.0
        %788 = vmatprep.subr.mxu0 0.0
        %789 = vmatpush1.msra.mxu0 0.0
        %790 = vmatprep.subr.mxu0 0.0
        %791 = vmatpush1.msra.mxu0 0.0
        %792 = vmatprep.subr.mxu0 0.0
        %793 = vmatpush1.msra.mxu0 0.0
        %794 = vmatprep.subr.mxu0 0.0
        %795 = vmatpush1.msra.mxu0 0.0
        %796 = vmatprep.subr.mxu0 0.0
        %797 = vmatpush1.msra.mxu0 0.0
        %798 = vmatprep.subr.mxu0 0.0
        %799 = vmatpush1.msra.mxu0 0.0
        %800 = vmatprep.subr.mxu0 0.0
        %801 = vmatpush1.msra.mxu0 0.0
        %802 = vmatprep.subr.mxu0 0.0
        %803 = vmatpush1.msra.mxu0 0.0
        %804 = vmatprep.subr.mxu0 0.0
        %805 = vmatpush1.msra.mxu0 0.0
        %806 = vmatprep.subr.mxu0 0.0
        %807 = vmatpush1.msra.mxu0 0.0
        %808 = vmatprep.subr.mxu0 0.0
        %809 = vmatpush1.msra.mxu0 0.0
        %810 = vmatprep.mubr.f32.mxu0 0.0
        %811 = vmatmul.mubr.f32.gmra.mrb[0].mxu0 %v730
        %v812 = vpop.f32.mrb[0].mxu0
        %v813 = vadd.f32 %v683, %v812
        %v814 = vpop.f32.mrb[0].mxu0
        %815 = vmatprep.mubr.f32.mxu0 0.0
        %816 = vmatmul.mubr.f32.gmra.mrb[0].mxu0 %v732
        %v817 = vpop.f32.mrb[0].mxu0
        %v818 = vadd.f32 %v687, %v817
        %v819 = vpop.f32.mrb[0].mxu0
        %820 = vmatprep.mubr.f32.mxu0 0.0
        %821 = vmatmul.mubr.f32.gmra.mrb[0].mxu0 %v734
        %v822 = vpop.f32.mrb[0].mxu0
        %v823 = vadd.f32 %v691, %v822
        %v824 = vpop.f32.mrb[0].mxu0
        %825 = vmatprep.mubr.f32.mxu0 0.0
        %826 = vmatmul.mubr.f32.gmra.mrb[0].mxu0 %v736
        %v827 = vpop.f32.mrb[0].mxu0
        %v828 = vadd.f32 %v695, %v827
        %v829 = vpop.f32.mrb[0].mxu0
        %830 = vmatprep.mubr.f32.mxu0 0.0
        %831 = vmatmul.mubr.f32.gmra.mrb[0].mxu0 %v738
        %v832 = vpop.f32.mrb[0].mxu0
        %v833 = vadd.f32 %v699, %v832
        %v834 = vpop.f32.mrb[0].mxu0
        %835 = vmatprep.mubr.f32.mxu0 0.0
        %836 = vmatmul.mubr.f32.gmra.mrb[0].mxu0 %v740
        %v837 = vpop.f32.mrb[0].mxu0
        %v838 = vadd.f32 %v703, %v837
        %v839 = vpop.f32.mrb[0].mxu0
        %840 = vmatprep.mubr.f32.mxu0 0.0
        %841 = vmatmul.mubr.f32.gmra.mrb[0].mxu0 %v742
        %v842 = vpop.f32.mrb[0].mxu0
        %v843 = vadd.f32 %v707, %v842
        %v844 = vpop.f32.mrb[0].mxu0
        %845 = vmatprep.mubr.f32.mxu0 0.0
        %846 = vmatmul.mubr.f32.gmra.mrb[0].mxu0 %v744
        %v847 = vpop.f32.mrb[0].mxu0
        %v848 = vadd.f32 %v711, %v847
        %v849 = vpop.f32.mrb[0].mxu0
        %850 = vdwg.mxu0
        %v851 = vadd.f32 %v461, %v813
        %v852 = vadd.f32 %v466, %v818
        %v853 = vadd.f32 %v471, %v823
        %v854 = vadd.f32 %v476, %v828
        %s855 = scalar_lea.vmem [#allocation2], 64
        %v856 = vld [vmem:[%s855] sm:$0xff]
        %v857 = vld [vmem:[%s855 + $0x8] sm:$0xff]
        %v858 = vld [vmem:[%s855 + $0x10] sm:$0xff]
        %v859 = vld [vmem:[%s855 + $0x18] sm:$0xff]
        %v860 = vld [vmem:[%s855 + $0x20] sm:$0xff]
        %v861 = vld [vmem:[%s855 + $0x28] sm:$0xff]
        %v862 = vld [vmem:[%s855 + $0x30] sm:$0xff]
        %v863 = vld [vmem:[%s855 + $0x38] sm:$0xff]
        %865 = vset.pattern.permute.xlu0 48
        %866 = vperm.xlu0 %865, %v856
        %v867 = vpop.permute.xlu0 %866
        %870 = vset.pattern.permute.xlu0 48
        %871 = vperm.xlu0 %870, %v857
        %v872 = vpop.permute.xlu0 %871
        %875 = vset.pattern.permute.xlu0 48
        %876 = vperm.xlu0 %875, %v858
        %v877 = vpop.permute.xlu0 %876
        %880 = vset.pattern.permute.xlu0 48
        %881 = vperm.xlu0 %880, %v859
        %v882 = vpop.permute.xlu0 %881
        %885 = vset.pattern.permute.xlu0 48
        %886 = vperm.xlu0 %885, %v860
        %v887 = vpop.permute.xlu0 %886
        %890 = vset.pattern.permute.xlu0 48
        %891 = vperm.xlu0 %890, %v861
        %v892 = vpop.permute.xlu0 %891
        %895 = vset.pattern.permute.xlu0 48
        %896 = vperm.xlu0 %895, %v862
        %v897 = vpop.permute.xlu0 %896
        %900 = vset.pattern.permute.xlu0 48
        %901 = vperm.xlu0 %900, %v863
        %v902 = vpop.permute.xlu0 %901
        %v904 = vsel %vm527, %v856, 0
        %v906 = vsel %vm527, %v857, 0
        %v908 = vsel %vm527, %v858, 0
        %v910 = vsel %vm527, %v859, 0
        %v912 = vsel %vm527, %v860, 0
        %v914 = vsel %vm527, %v861, 0
        %v916 = vsel %vm527, %v862, 0
        %v918 = vsel %vm527, %v863, 0
        %920 = vmatprep.subr.mxu0 0.0
        %921 = vmatpush1.msra.mxu0 %v851
        %922 = vmatprep.subr.mxu0 0.0
        %923 = vmatpush1.msra.mxu0 %v852
        %924 = vmatprep.subr.mxu0 0.0
        %925 = vmatpush1.msra.mxu0 %v853
        %926 = vmatprep.subr.mxu0 0.0
        %927 = vmatpush1.msra.mxu0 %v854
        %928 = vmatprep.subr.mxu0 0.0
        %929 = vmatpush1.msra.mxu0 %v355
        %930 = vmatprep.subr.mxu0 0.0
        %931 = vmatpush1.msra.mxu0 %v356
        %932 = vmatprep.subr.mxu0 0.0
        %933 = vmatpush1.msra.mxu0 0.0
        %934 = vmatprep.subr.mxu0 0.0
        %935 = vmatpush1.msra.mxu0 0.0
        %936 = vmatprep.subr.mxu0 0.0
        %937 = vmatpush1.msra.mxu0 0.0
        %938 = vmatprep.subr.mxu0 0.0
        %939 = vmatpush1.msra.mxu0 0.0
        %940 = vmatprep.subr.mxu0 0.0
        %941 = vmatpush1.msra.mxu0 0.0
        %942 = vmatprep.subr.mxu0 0.0
        %943 = vmatpush1.msra.mxu0 0.0
        %944 = vmatprep.subr.mxu0 0.0
        %945 = vmatpush1.msra.mxu0 0.0
        %946 = vmatprep.subr.mxu0 0.0
        %947 = vmatpush1.msra.mxu0 0.0
        %948 = vmatprep.subr.mxu0 0.0
        %949 = vmatpush1.msra.mxu0 0.0
        %950 = vmatprep.subr.mxu0 0.0
        %951 = vmatpush1.msra.mxu0 0.0
        %952 = vmatprep.subr.mxu0 0.0
        %953 = vmatpush1.msra.mxu0 0.0
        %954 = vmatprep.subr.mxu0 0.0
        %955 = vmatpush1.msra.mxu0 0.0
        %956 = vmatprep.subr.mxu0 0.0
        %957 = vmatpush1.msra.mxu0 0.0
        %958 = vmatprep.subr.mxu0 0.0
        %959 = vmatpush1.msra.mxu0 0.0
        %960 = vmatprep.subr.mxu0 0.0
        %961 = vmatpush1.msra.mxu0 0.0
        %962 = vmatprep.subr.mxu0 0.0
        %963 = vmatpush1.msra.mxu0 0.0
        %964 = vmatprep.subr.mxu0 0.0
        %965 = vmatpush1.msra.mxu0 0.0
        %966 = vmatprep.subr.mxu0 0.0
        %967 = vmatpush1.msra.mxu0 0.0
        %968 = vmatprep.subr.mxu0 0.0
        %969 = vmatpush1.msra.mxu0 0.0
        %970 = vmatprep.subr.mxu0 0.0
        %971 = vmatpush1.msra.mxu0 0.0
        %972 = vmatprep.subr.mxu0 0.0
        %973 = vmatpush1.msra.mxu0 0.0
        %974 = vmatprep.subr.mxu0 0.0
        %975 = vmatpush1.msra.mxu0 0.0
        %976 = vmatprep.subr.mxu0 0.0
        %977 = vmatpush1.msra.mxu0 0.0
        %978 = vmatprep.subr.mxu0 0.0
        %979 = vmatpush1.msra.mxu0 0.0
        %980 = vmatprep.subr.mxu0 0.0
        %981 = vmatpush1.msra.mxu0 0.0
        %982 = vmatprep.subr.mxu0 0.0
        %983 = vmatpush1.msra.mxu0 0.0
        %984 = vmatprep.mubr.f32.mxu0 0.0
        %985 = vmatmul.mubr.f32.gmra.mrb[0].mxu0 %v904
        %v986 = vpop.f32.mrb[0].mxu0
        %v987 = vadd.f32 %v867, %v986
        %v988 = vpop.f32.mrb[0].mxu0
        %989 = vmatprep.mubr.f32.mxu0 0.0
        %990 = vmatmul.mubr.f32.gmra.mrb[0].mxu0 %v906
        %v991 = vpop.f32.mrb[0].mxu0
        %v992 = vadd.f32 %v872, %v991
        %v993 = vpop.f32.mrb[0].mxu0
        %994 = vmatprep.mubr.f32.mxu0 0.0
        %995 = vmatmul.mubr.f32.gmra.mrb[0].mxu0 %v908
        %v996 = vpop.f32.mrb[0].mxu0
        %v997 = vadd.f32 %v877, %v996
        %v998 = vpop.f32.mrb[0].mxu0
        %999 = vmatprep.mubr.f32.mxu0 0.0
        %1000 = vmatmul.mubr.f32.gmra.mrb[0].mxu0 %v910
        %v1001 = vpop.f32.mrb[0].mxu0
        %v1002 = vadd.f32 %v882, %v1001
        %v1003 = vpop.f32.mrb[0].mxu0
        %1004 = vmatprep.mubr.f32.mxu0 0.0
        %1005 = vmatmul.mubr.f32.gmra.mrb[0].mxu0 %v912
        %v1006 = vpop.f32.mrb[0].mxu0
        %v1007 = vadd.f32 %v887, %v1006
        %v1008 = vpop.f32.mrb[0].mxu0
        %1009 = vmatprep.mubr.f32.mxu0 0.0
        %1010 = vmatmul.mubr.f32.gmra.mrb[0].mxu0 %v914
        %v1011 = vpop.f32.mrb[0].mxu0
        %v1012 = vadd.f32 %v892, %v1011
        %v1013 = vpop.f32.mrb[0].mxu0
        %1014 = vmatprep.mubr.f32.mxu0 0.0
        %1015 = vmatmul.mubr.f32.gmra.mrb[0].mxu0 %v916
        %v1016 = vpop.f32.mrb[0].mxu0
        %v1017 = vadd.f32 %v897, %v1016
        %v1018 = vpop.f32.mrb[0].mxu0
        %1019 = vmatprep.mubr.f32.mxu0 0.0
        %1020 = vmatmul.mubr.f32.gmra.mrb[0].mxu0 %v918
        %v1021 = vpop.f32.mrb[0].mxu0
        %v1022 = vadd.f32 %v902, %v1021
        %v1023 = vpop.f32.mrb[0].mxu0
        %1024 = vdwg.mxu0
        %v1025 = vtanh.pop %v987
        %v1026 = vtanh.pop %v992
        %v1027 = vtanh.pop %v997
        %v1028 = vtanh.pop %v1002
        %v1029 = vxor.u32 %v1007, 2147483648
        %v1030 = vxor.u32 %v1012, 2147483648
        %v1031 = vxor.u32 %v1017, 2147483648
        %v1032 = vxor.u32 %v1022, 2147483648
        %v1033 = vmul.f32 %v1029, 1.442695
        %v1034 = vpow.pop %v1033
        %v1035 = vmul.f32 %v1030, 1.442695
        %v1036 = vpow.pop %v1035
        %v1037 = vmul.f32 %v1031, 1.442695
        %v1038 = vpow.pop %v1037
        %v1039 = vmul.f32 %v1032, 1.442695
        %v1040 = vpow.pop %v1039
        %v1041 = vadd.f32 %v1034, 1.0
        %v1042 = vadd.f32 %v1036, 1.0
        %v1043 = vadd.f32 %v1038, 1.0
        %v1044 = vadd.f32 %v1040, 1.0
        %v1045 = vrcp.pop %v1041
        %v1046 = vmul.f32 1.0, %v1045
        %v1047 = vrcp.pop %v1042
        %v1048 = vmul.f32 1.0, %v1047
        %v1049 = vrcp.pop %v1043
        %v1050 = vmul.f32 1.0, %v1049
        %v1051 = vrcp.pop %v1044
        %v1052 = vmul.f32 1.0, %v1051
        %v1053 = vmul.f32 %v1025, %v1046
        %v1054 = vmul.f32 %v1026, %v1048
        %v1055 = vmul.f32 %v1027, %v1050
        %v1056 = vmul.f32 %v1028, %v1052
        %1057 = vset.pattern.permute.xlu0 81
        %1058 = vperm.xlu0 %1057, %v856
        %v1059 = vpop.permute.xlu0 %1058
        %1060 = vset.pattern.permute.xlu0 81
        %1061 = vperm.xlu0 %1060, %v857
        %v1062 = vpop.permute.xlu0 %1061
        %1063 = vset.pattern.permute.xlu0 81
        %1064 = vperm.xlu0 %1063, %v858
        %v1065 = vpop.permute.xlu0 %1064
        %1066 = vset.pattern.permute.xlu0 81
        %1067 = vperm.xlu0 %1066, %v859
        %v1068 = vpop.permute.xlu0 %1067
        %1069 = vset.pattern.permute.xlu0 81
        %1070 = vperm.xlu0 %1069, %v860
        %v1071 = vpop.permute.xlu0 %1070
        %1073 = vset.pattern.permute.xlu0 81
        %1074 = vperm.xlu0 %1073, %v861
        %v1075 = vpop.permute.xlu0 %1074
        %1077 = vset.pattern.permute.xlu0 81
        %1078 = vperm.xlu0 %1077, %v862
        %v1079 = vpop.permute.xlu0 %1078
        %1081 = vset.pattern.permute.xlu0 81
        %1082 = vperm.xlu0 %1081, %v863
        %v1083 = vpop.permute.xlu0 %1082
        %1085 = vrot.lane.b32.xlu0 %v856, 79
        %v1086 = vpop.permute.xlu0 %1085
        %1087 = vrot.lane.b32.xlu0 %v857, 79
        %v1088 = vpop.permute.xlu0 %1087
        %1089 = vrot.lane.b32.xlu0 %v858, 79
        %v1090 = vpop.permute.xlu0 %1089
        %1091 = vrot.lane.b32.xlu0 %v859, 79
        %v1092 = vpop.permute.xlu0 %1091
        %1093 = vrot.lane.b32.xlu0 %v860, 79
        %v1094 = vpop.permute.xlu0 %1093
        %1095 = vrot.lane.b32.xlu0 %v861, 79
        %v1096 = vpop.permute.xlu0 %1095
        %1097 = vrot.lane.b32.xlu0 %v862, 79
        %v1098 = vpop.permute.xlu0 %1097
        %1099 = vrot.lane.b32.xlu0 %v863, 79
        %v1100 = vpop.permute.xlu0 %1099
        %v1101 = vsel %vm729, %v1086, 0
        %v1103 = vsel %vm729, %v1088, 0
        %v1105 = vsel %vm729, %v1090, 0
        %v1107 = vsel %vm729, %v1092, 0
        %v1109 = vsel %vm729, %v1094, 0
        %v1111 = vsel %vm729, %v1096, 0
        %v1113 = vsel %vm729, %v1098, 0
        %v1115 = vsel %vm729, %v1100, 0
        %1117 = vmatprep.subr.mxu0 0.0
        %1118 = vmatpush1.msra.mxu0 %v1053
        %1119 = vmatprep.subr.mxu0 0.0
        %1120 = vmatpush1.msra.mxu0 %v1054
        %1121 = vmatprep.subr.mxu0 0.0
        %1122 = vmatpush1.msra.mxu0 %v1055
        %1123 = vmatprep.subr.mxu0 0.0
        %1124 = vmatpush1.msra.mxu0 %v1056
        %1125 = vmatprep.subr.mxu0 0.0
        %1126 = vmatpush1.msra.mxu0 0.0
        %1127 = vmatprep.subr.mxu0 0.0
        %1128 = vmatpush1.msra.mxu0 0.0
        %1129 = vmatprep.subr.mxu0 0.0
        %1130 = vmatpush1.msra.mxu0 0.0
        %1131 = vmatprep.subr.mxu0 0.0
        %1132 = vmatpush1.msra.mxu0 0.0
        %1133 = vmatprep.subr.mxu0 0.0
        %1134 = vmatpush1.msra.mxu0 0.0
        %1135 = vmatprep.subr.mxu0 0.0
        %1136 = vmatpush1.msra.mxu0 0.0
        %1137 = vmatprep.subr.mxu0 0.0
        %1138 = vmatpush1.msra.mxu0 0.0
        %1139 = vmatprep.subr.mxu0 0.0
        %1140 = vmatpush1.msra.mxu0 0.0
        %1141 = vmatprep.subr.mxu0 0.0
        %1142 = vmatpush1.msra.mxu0 0.0
        %1143 = vmatprep.subr.mxu0 0.0
        %1144 = vmatpush1.msra.mxu0 0.0
        %1145 = vmatprep.subr.mxu0 0.0
        %1146 = vmatpush1.msra.mxu0 0.0
        %1147 = vmatprep.subr.mxu0 0.0
        %1148 = vmatpush1.msra.mxu0 0.0
        %1149 = vmatprep.subr.mxu0 0.0
        %1150 = vmatpush1.msra.mxu0 0.0
        %1151 = vmatprep.subr.mxu0 0.0
        %1152 = vmatpush1.msra.mxu0 0.0
        %1153 = vmatprep.subr.mxu0 0.0
        %1154 = vmatpush1.msra.mxu0 0.0
        %1155 = vmatprep.subr.mxu0 0.0
        %1156 = vmatpush1.msra.mxu0 0.0
        %1157 = vmatprep.subr.mxu0 0.0
        %1158 = vmatpush1.msra.mxu0 0.0
        %1159 = vmatprep.subr.mxu0 0.0
        %1160 = vmatpush1.msra.mxu0 0.0
        %1161 = vmatprep.subr.mxu0 0.0
        %1162 = vmatpush1.msra.mxu0 0.0
        %1163 = vmatprep.subr.mxu0 0.0
        %1164 = vmatpush1.msra.mxu0 0.0
        %1165 = vmatprep.subr.mxu0 0.0
        %1166 = vmatpush1.msra.mxu0 0.0
        %1167 = vmatprep.subr.mxu0 0.0
        %1168 = vmatpush1.msra.mxu0 0.0
        %1169 = vmatprep.subr.mxu0 0.0
        %1170 = vmatpush1.msra.mxu0 0.0
        %1171 = vmatprep.subr.mxu0 0.0
        %1172 = vmatpush1.msra.mxu0 0.0
        %1173 = vmatprep.subr.mxu0 0.0
        %1174 = vmatpush1.msra.mxu0 0.0
        %1175 = vmatprep.subr.mxu0 0.0
        %1176 = vmatpush1.msra.mxu0 0.0
        %1177 = vmatprep.subr.mxu0 0.0
        %1178 = vmatpush1.msra.mxu0 0.0
        %1179 = vmatprep.subr.mxu0 0.0
        %1180 = vmatpush1.msra.mxu0 0.0
        %1181 = vmatprep.mubr.f32.mxu0 0.0
        %1182 = vmatmul.mubr.f32.gmra.mrb[0].mxu0 %v1101
        %v1183 = vpop.f32.mrb[0].mxu0
        %v1184 = vpop.f32.mrb[0].mxu0
        %1185 = vmatprep.mubr.f32.mxu0 0.0
        %1186 = vmatmul.mubr.f32.gmra.mrb[0].mxu0 %v1103
        %v1187 = vpop.f32.mrb[0].mxu0
        %v1188 = vpop.f32.mrb[0].mxu0
        %1189 = vmatprep.mubr.f32.mxu0 0.0
        %1190 = vmatmul.mubr.f32.gmra.mrb[0].mxu0 %v1105
        %v1191 = vpop.f32.mrb[0].mxu0
        %v1192 = vpop.f32.mrb[0].mxu0
        %1193 = vmatprep.mubr.f32.mxu0 0.0
        %1194 = vmatmul.mubr.f32.gmra.mrb[0].mxu0 %v1107
        %v1195 = vpop.f32.mrb[0].mxu0
        %v1196 = vpop.f32.mrb[0].mxu0
        %1197 = vmatprep.mubr.f32.mxu0 0.0
        %1198 = vmatmul.mubr.f32.gmra.mrb[0].mxu0 %v1109
        %v1199 = vpop.f32.mrb[0].mxu0
        %v1200 = vadd.f32 %v1071, %v1199
        %v1201 = vpop.f32.mrb[0].mxu0
        %1202 = vmatprep.mubr.f32.mxu0 0.0
        %1203 = vmatmul.mubr.f32.gmra.mrb[0].mxu0 %v1111
        %v1204 = vpop.f32.mrb[0].mxu0
        %v1205 = vadd.f32 %v1075, %v1204
        %v1206 = vpop.f32.mrb[0].mxu0
        %1207 = vmatprep.mubr.f32.mxu0 0.0
        %1208 = vmatmul.mubr.f32.gmra.mrb[0].mxu0 %v1113
        %v1209 = vpop.f32.mrb[0].mxu0
        %v1210 = vadd.f32 %v1079, %v1209
        %v1211 = vpop.f32.mrb[0].mxu0
        %1212 = vmatprep.mubr.f32.mxu0 0.0
        %1213 = vmatmul.mubr.f32.gmra.mrb[0].mxu0 %v1115
        %v1214 = vpop.f32.mrb[0].mxu0
        %v1215 = vadd.f32 %v1083, %v1214
        %v1216 = vpop.f32.mrb[0].mxu0
        %1217 = vdwg.mxu0
        %v1218 = vadd.f32 %v833, %v1200
        %v1219 = vadd.f32 %v838, %v1205
        %v1220 = vadd.f32 %v843, %v1210
        %v1221 = vadd.f32 %v848, %v1215
        %v1222 = vld [vmem:[%s5] sm:$0xff]
        %v1223 = vld [vmem:[%s5 + $0x8] sm:$0x3f]
        %1225 = vset.pattern.permute.xlu0 32
        %1226 = vperm.xlu0 %1225, %v1222
        %v1227 = vpop.permute.xlu0 %1226
        %1230 = vset.pattern.permute.xlu0 32
        %1231 = vperm.xlu0 %1230, %v1223
        %v1232 = vpop.permute.xlu0 %1231
        %v1234 = vsel %vm729, %v1222, 0
        %v1236 = vsel %vm729, %v1223, 0
        %1238 = vmatprep.subr.mxu0 0.0
        %1239 = vmatpush1.msra.mxu0 %v1218
        %1240 = vmatprep.subr.mxu0 0.0
        %1241 = vmatpush1.msra.mxu0 %v1219
        %1242 = vmatprep.subr.mxu0 0.0
        %1243 = vmatpush1.msra.mxu0 %v1220
        %1244 = vmatprep.subr.mxu0 0.0
        %1245 = vmatpush1.msra.mxu0 %v1221
        %1246 = vmatprep.subr.mxu0 0.0
        %1247 = vmatpush1.msra.mxu0 0.0
        %1248 = vmatprep.subr.mxu0 0.0
        %1249 = vmatpush1.msra.mxu0 0.0
        %1250 = vmatprep.subr.mxu0 0.0
        %1251 = vmatpush1.msra.mxu0 0.0
        %1252 = vmatprep.subr.mxu0 0.0
        %1253 = vmatpush1.msra.mxu0 0.0
        %1254 = vmatprep.subr.mxu0 0.0
        %1255 = vmatpush1.msra.mxu0 0.0
        %1256 = vmatprep.subr.mxu0 0.0
        %1257 = vmatpush1.msra.mxu0 0.0
        %1258 = vmatprep.subr.mxu0 0.0
        %1259 = vmatpush1.msra.mxu0 0.0
        %1260 = vmatprep.subr.mxu0 0.0
        %1261 = vmatpush1.msra.mxu0 0.0
        %1262 = vmatprep.subr.mxu0 0.0
        %1263 = vmatpush1.msra.mxu0 0.0
        %1264 = vmatprep.subr.mxu0 0.0
        %1265 = vmatpush1.msra.mxu0 0.0
        %1266 = vmatprep.subr.mxu0 0.0
        %1267 = vmatpush1.msra.mxu0 0.0
        %1268 = vmatprep.subr.mxu0 0.0
        %1269 = vmatpush1.msra.mxu0 0.0
        %1270 = vmatprep.subr.mxu0 0.0
        %1271 = vmatpush1.msra.mxu0 0.0
        %1272 = vmatprep.subr.mxu0 0.0
        %1273 = vmatpush1.msra.mxu0 0.0
        %1274 = vmatprep.subr.mxu0 0.0
        %1275 = vmatpush1.msra.mxu0 0.0
        %1276 = vmatprep.subr.mxu0 0.0
        %1277 = vmatpush1.msra.mxu0 0.0
        %1278 = vmatprep.subr.mxu0 0.0
        %1279 = vmatpush1.msra.mxu0 0.0
        %1280 = vmatprep.subr.mxu0 0.0
        %1281 = vmatpush1.msra.mxu0 0.0
        %1282 = vmatprep.subr.mxu0 0.0
        %1283 = vmatpush1.msra.mxu0 0.0
        %1284 = vmatprep.subr.mxu0 0.0
        %1285 = vmatpush1.msra.mxu0 0.0
        %1286 = vmatprep.subr.mxu0 0.0
        %1287 = vmatpush1.msra.mxu0 0.0
        %1288 = vmatprep.subr.mxu0 0.0
        %1289 = vmatpush1.msra.mxu0 0.0
        %1290 = vmatprep.subr.mxu0 0.0
        %1291 = vmatpush1.msra.mxu0 0.0
        %1292 = vmatprep.subr.mxu0 0.0
        %1293 = vmatpush1.msra.mxu0 0.0
        %1294 = vmatprep.subr.mxu0 0.0
        %1295 = vmatpush1.msra.mxu0 0.0
        %1296 = vmatprep.subr.mxu0 0.0
        %1297 = vmatpush1.msra.mxu0 0.0
        %1298 = vmatprep.subr.mxu0 0.0
        %1299 = vmatpush1.msra.mxu0 0.0
        %1300 = vmatprep.subr.mxu0 0.0
        %1301 = vmatpush1.msra.mxu0 0.0
        %1302 = vmatprep.mubr.f32.mxu0 0.0
        %1303 = vmatmul.mubr.f32.gmra.mrb[0].mxu0 %v1234
        %v1304 = vpop.f32.mrb[0].mxu0
        %v1305 = vadd.f32 %v1227, %v1304
        %v1306 = vpop.f32.mrb[0].mxu0
        %1307 = vmatprep.mubr.f32.mxu0 0.0
        %1308 = vmatmul.mubr.f32.gmra.mrb[0].mxu0 %v1236
        %v1309 = vpop.f32.mrb[0].mxu0
        %v1310 = vadd.f32 %v1232, %v1309
        %v1311 = vpop.f32.mrb[0].mxu0
        %1312 = vdwg.mxu0
        %v1313 = vmul.f32 %v1305, 1.442695
        %v1314 = vpow.pop %v1313
        %v1316 = vrot.slane %v1314, 7
        %v1318 = vmul.f32 %v340, %v1316
        %vm1321 = vcmask 1041408
        %v1322 = vrot.slane %v1305, 6
        %v1323 = vrot.slane %v1310, 6
        %v1324 = vsel %vm1321, %v1322, %v1323
        %v1326 = vadd.f32 %v1318, %v1324
        %vm1327 = vcmask 1040384
        %v1328 = vsel %vm1327, %v340, %v1326
        %vm1329 = vcmask 523264
        %1330 = vst.msk [vmem:[%s315] sm:$0xff] %vm1329, %v1328
        %vm1331 = vcmask 522240
        %1332 = vst.msk [vmem:[%s339] sm:$0x7f] %vm1331, %v1305
        %s1333 = sand.u32 %s172, 1
        %s1334 = scalar_lea.sflag [#allocation4], %s1333
        %s1335 = sand.u32 %s172, 1
        %s1336 = smul.addr %s1335, 8
        %s1337 = scalar_lea.vmem [#allocation5], %s1336
        %p1338 = scmp.lt.s32.totalorder %s23, 1
        %s1339 = scalar_select %p1338, %s23, 1
        %s1340 = smul.addr %s1339, 8
        %s1341 = scalar_lea.vmem %s7, %s1340
        // Predicated region
        $region49: #{tpu_custom_call.1} parent=43 // pred_check
          %p1342 = pneg %p182
        $region50: #{tpu_custom_call.1} parent=43 // pred_check_branch
          %1344 = sbr.rel (%p1342) target = $region52
        $region51: #{tpu_custom_call.1} parent=43 // pred_region
          %s1346 = ssub.s32 128, 128
          %1347 = vsyncadd %s1334, %s1346
          %s1348 = smul.addr %s23, 128
          %s1349 = scalar_lea.hbm %s6, %s1348
          %s1351 = sshll.u32 %s1337, 4
          %s1352 = int_to_ptr.vmem [resolvable:$true] %s1351
          %1354 = dma.vmem_to_hbm [thread:$0]  %s1352, 128, %s1349, %s1334
        $region52: #{tpu_custom_call.1} parent=43 // pred_fallthru
          _
        // Predicated region
        $region53: #{tpu_custom_call.1} parent=43 // pred_check
          %p1355 = pneg %p208
        $region54: #{tpu_custom_call.1} parent=43 // pred_check_branch
          %1357 = sbr.rel (%p1355) target = $region56
        $region55: #{tpu_custom_call.1} parent=43 // pred_region
          _
        $region56: #{tpu_custom_call.1} parent=43 // pred_fallthru
          _
      $region44: #{tpu_custom_call.1} parent=5 // pred_fallthru
        _
      %p1358 = scmp.le.s32.totalorder 2, %s18
      // Predicated region
      $region57: #{tpu_custom_call.1} parent=5 // pred_check
        %p1359 = pneg %p1358
      $region58: #{tpu_custom_call.1} parent=5 // pred_check_branch
        %1361 = sbr.rel (%p1359) target = $region60
      $region59: #{tpu_custom_call.1} parent=5 // pred_region
        %s1362 = ssub.s32 %s18, 2
        // Predicated region
        $region61: #{tpu_custom_call.1} parent=59 // pred_check
          %p1363 = pneg %p188
        $region62: #{tpu_custom_call.1} parent=59 // pred_check_branch
          %1365 = sbr.rel (%p1363) target = $region64
        $region63: #{tpu_custom_call.1} parent=59 // pred_region
          %s1366 = sand.u32 %s173, 1
          %s1367 = scalar_lea.sflag [#allocation4], %s1366
          %s1368 = sand.u32 %s173, 1
          %s1369 = smul.addr %s1368, 8
          %s1370 = scalar_lea.vmem [#allocation5], %s1369
          %1371 = dma.done %s1367, 128
        $region64: #{tpu_custom_call.1} parent=59 // pred_fallthru
          _
        // Predicated region
        $region65: #{tpu_custom_call.1} parent=59 // pred_check
          %p1372 = pneg %p214
        $region66: #{tpu_custom_call.1} parent=59 // pred_check_branch
          %1374 = sbr.rel (%p1372) target = $region68
        $region67: #{tpu_custom_call.1} parent=59 // pred_region
          %p1375 = scmp.lt.s32.totalorder %s24, 1
          %s1376 = scalar_select %p1375, %s24, 1
          %s1377 = smul.addr %s1376, 8
          %s1378 = scalar_lea.vmem %s7, %s1377
        $region68: #{tpu_custom_call.1} parent=59 // pred_fallthru
          _
      $region60: #{tpu_custom_call.1} parent=5 // pred_fallthru
        _
    $region6: #{tpu_custom_call.1} parent=1 // loop_footer
      %s22 = sadd.s32 1, %s18
    $region7: #{tpu_custom_call.1} parent=1 // loop_footer_branch
      %17 = sbr.rel target = $region3
    $region8: #{tpu_custom_call.1} parent=1 // loop_exit
      _
    %1379 = vsyncpa [#allocation3], 1
    %s1380 = scalar_lea.sflag [#allocation3], 1
    %1381 = vsyncpa %s1380, 1
    %1382 = vsyncpa [#allocation4], 1
    %s1383 = scalar_lea.sflag [#allocation4], 1
    %1384 = vsyncpa %s1383, 1

</llo_original>
